<compile_context>
chip_gen: v6e
topology: v6e:2x2x1
jax: 0.10.0
libtpu: 0.0.40
codegen_flags: <defaults>
</compile_context>

<pallas_src>
import functools

import jax
import jax.numpy as jnp
from jax import lax
from jax.experimental import pallas as pl
from jax.experimental.pallas import tpu as pltpu


def _dkt_kernel(feat_ref, w_ih_t_ref, w_hh_t_ref, b_lstm_ref, w_out_t_ref,
                b_out_ref, y_ref, *, bblk, seq_len, hidden_dim):
    B, T, H = bblk, seq_len, hidden_dim
    G = 4 * H
    F = w_ih_t_ref.shape[0]

    # --- one-hot embedding (iota compare; index -1 -> all-zero row, matching
    #     the extra zero embedding row in the PyTorch module) -----------------
    feats = feat_ref[0]                                            # (T*B, 1) i32
    x_onehot = jnp.where(
        feats == lax.broadcasted_iota(jnp.int32, (T * B, F), 1),
        1.0, 0.0).astype(jnp.float32)                              # (T*B, F)
    # TODO(synk): for large feature_dim replace this one-hot matmul with a row
    # gather of w_ih_t (scalar-prefetched indices); at F=32 the matmul is fine.

    # --- fused input projection for ALL timesteps, both LSTM biases folded ---
    xw = jnp.dot(x_onehot, w_ih_t_ref[...],
                 preferred_element_type=jnp.float32) + b_lstm_ref[...]  # (T*B,4H)

    w_hh_t = w_hh_t_ref[...]                                       # (H, 4H)

    # Per-lane activation constants (hoisted out of the loop): the i/f/o
    # sigmoids and the g tanh become ONE tanh pass over the 4H gate lanes,
    # using sigmoid(x) = 0.5*tanh(0.5*x) + 0.5.  PyTorch gate order [i|f|g|o].
    lane = lax.broadcasted_iota(jnp.int32, (1, G), 1)
    is_g = jnp.logical_and(lane >= 2 * H, lane < 3 * H)
    a_scale = jnp.where(is_g, 1.0, 0.5).astype(jnp.float32)        # pre & post
    a_off = jnp.where(is_g, 0.0, 0.5).astype(jnp.float32)

    h = jnp.zeros((B, H), jnp.float32)
    c = jnp.zeros((B, H), jnp.float32)

    # --- sequential LSTM recurrence, statically unrolled (T is small) --------
    # h_{T-1} is never used downstream (yt = yt[:, :-1, :]).
    # TODO(synk): for long sequences switch to lax.fori_loop (unroll~4-8) with
    # a VMEM history and a time-chunked input projection (emit_pipeline) so the
    # working set fits v7x's 64 MiB VMEM and vreg pressure stays bounded.
    hs = []
    for t in range(T - 1):
        gates = xw[t * B:(t + 1) * B, :] + jnp.dot(
            h, w_hh_t, preferred_element_type=jnp.float32)         # (B, 4H)
        act = a_scale * jnp.tanh(a_scale * gates) + a_off          # 1 EUP pass
        i_g = act[:, 0 * H:1 * H]
        f_g = act[:, 1 * H:2 * H]
        g_g = act[:, 2 * H:3 * H]
        o_g = act[:, 3 * H:4 * H]
        c = f_g * c + i_g * g_g
        h = o_g * jnp.tanh(c)                                      # 2nd EUP pass
        hs.append(h)                                               # stays in vregs

    # --- output projection + sigmoid, off the serial chain; one lane-dense
    #     (Bblk, O_pad) unmasked store per timestep ---------------------------
    w_out_t = w_out_t_ref[...]                                     # (H, O_pad)
    b_out = b_out_ref[...]                                         # (1, O_pad)
    for t in range(T - 1):
        z = jnp.dot(hs[t], w_out_t, preferred_element_type=jnp.float32) + b_out
        y_ref[0, t * B:(t + 1) * B, :] = 0.5 * jnp.tanh(0.5 * z) + 0.5


def dkt_forward(features, questions, w_ih, w_hh, b_ih, b_hh, w_out, b_out, *,
                feature_dim, hidden_dim, output_dim, num_batch_blocks=1):
    """features/questions: (B, T) int32 with trailing -1 padding.
    Weights use PyTorch layouts: w_ih (4H, F), w_hh (4H, H), w_out (O, H).
    Returns pred_res: (B, T-1) float32."""
    B, T = features.shape
    H, O, F = hidden_dim, output_dim, feature_dim
    G = 4 * H
    assert w_ih.shape == (G, F) and w_hh.shape == (G, H)
    assert w_out.shape == (O, H)

    # ---- pad batch to a sublane multiple (>= 8) and split into grid blocks --
    # num_batch_blocks=1 here; set to 2 on v7x with large batches so the
    # "parallel" grid axis shards the independent recurrences across both TCs.
    NB = num_batch_blocks
    bblk = ((B + 8 * NB - 1) // (8 * NB)) * 8
    B_pad = bblk * NB
    O_pad = ((O + 127) // 128) * 128                       # lane-dense output

    feat_p = jnp.pad(features.astype(jnp.int32), ((0, B_pad - B), (0, 0)),
                     constant_values=-1)
    # Time-major within each batch block: row index = t*bblk + b.
    feat_blk = (feat_p.reshape(NB, bblk, T).transpose(0, 2, 1)
                .reshape(NB, T * bblk, 1))

    # ---- weight layout plumbing (cheap XLA ops; kernel is transpose-free) ---
    w_ih_t = w_ih.T.astype(jnp.float32)                            # (F, 4H)
    w_hh_t = w_hh.T.astype(jnp.float32)                            # (H, 4H)
    b_lstm = (b_ih + b_hh).astype(jnp.float32).reshape(1, G)       # fused biases
    w_out_t = jnp.zeros((H, O_pad), jnp.float32).at[:, :O].set(w_out.T)
    b_out_p = jnp.zeros((1, O_pad), jnp.float32).at[:, :O].set(b_out.reshape(1, O))

    kernel = functools.partial(_dkt_kernel, bblk=bblk, seq_len=T, hidden_dim=H)
    y_blk = pl.pallas_call(
        kernel,
        out_shape=jax.ShapeDtypeStruct((NB, (T - 1) * bblk, O_pad), jnp.float32),
        grid=(NB,),
        in_specs=[
            pl.BlockSpec((1, T * bblk, 1), lambda i: (i, 0, 0)),
            pl.BlockSpec((F, G), lambda i: (0, 0)),
            pl.BlockSpec((H, G), lambda i: (0, 0)),
            pl.BlockSpec((1, G), lambda i: (0, 0)),
            pl.BlockSpec((H, O_pad), lambda i: (0, 0)),
            pl.BlockSpec((1, O_pad), lambda i: (0, 0)),
        ],
        out_specs=pl.BlockSpec((1, (T - 1) * bblk, O_pad), lambda i: (i, 0, 0)),
        compiler_params=pltpu.CompilerParams(
            dimension_semantics=("parallel",),
            vmem_limit_bytes=32 * 1024 * 1024),
    )(feat_blk, w_ih_t, w_hh_t, b_lstm, w_out_t, b_out_p)

    # ---- undo the lane-dense / time-major layout; next-question gather ------
    yt = (y_blk.reshape(NB, T - 1, bblk, O_pad).transpose(0, 2, 1, 3)
          .reshape(B_pad, T - 1, O_pad)[:B, :, :O])                # (B, T-1, O)
    next_q = questions[:, 1:]
    safe_q = jnp.where(next_q >= 0, next_q, 0)
    pred = jnp.take_along_axis(yt, safe_q[..., None], axis=-1)[..., 0]
    return jnp.where(next_q >= 0, pred, 0.0)                       # (B, T-1)


def _reference(features, questions, w_ih, w_hh, b_ih, b_hh, w_out, b_out, *,
               feature_dim, hidden_dim, output_dim):
    """Pure-JAX replica of DKT.forward (PyTorch semantics)."""
    B, T = features.shape
    x = (features[..., None] ==
         jnp.arange(feature_dim)[None, None, :]).astype(jnp.float32)   # (B,T,F)

    def step(carry, xt):
        h, c = carry
        gates = xt @ w_ih.T + h @ w_hh.T + b_ih + b_hh
        i, f, g, o = jnp.split(gates, 4, axis=-1)
        c = jax.nn.sigmoid(f) * c + jax.nn.sigmoid(i) * jnp.tanh(g)
        h = jax.nn.sigmoid(o) * jnp.tanh(c)
        return (h, c), h

    h0 = jnp.zeros((B, hidden_dim), jnp.float32)
    c0 = jnp.zeros((B, hidden_dim), jnp.float32)
    _, hs = lax.scan(step, (h0, c0), jnp.swapaxes(x, 0, 1))
    hs = jnp.swapaxes(hs, 0, 1)                                         # (B,T,H)

    # pack_padded/pad_packed: LSTM outputs at padded timesteps are zero.
    lens = jnp.sum(questions != -1, axis=1)
    mask = (jnp.arange(T)[None, :] < lens[:, None])[..., None]
    hs = jnp.where(mask, hs, 0.0)

    yt = jax.nn.sigmoid(hs @ w_out.T + b_out)[:, :-1, :]                # (B,T-1,O)
    next_q = questions[:, 1:]
    one_hot_qt = (next_q[..., None] ==
                  jnp.arange(output_dim)[None, None, :]).astype(jnp.float32)
    return jnp.sum(yt * one_hot_qt, axis=-1)


if __name__ == "__main__":
    # Small shapes consistent with the module.
    feature_dim = 32    # e.g. 2 * output_dim (skill, correctness) one-hot space
    hidden_dim = 32     # 4*H = 128 -> lane-dense gate matrices
    output_dim = 16
    batch = 4
    seq_len = 8

    root = jax.random.PRNGKey(0)
    ks = jax.random.split(root, 8)

    w_ih = 0.2 * jax.random.normal(ks[0], (4 * hidden_dim, feature_dim), jnp.float32)
    w_hh = 0.2 * jax.random.normal(ks[1], (4 * hidden_dim, hidden_dim), jnp.float32)
    b_ih = 0.1 * jax.random.normal(ks[2], (4 * hidden_dim,), jnp.float32)
    b_hh = 0.1 * jax.random.normal(ks[3], (4 * hidden_dim,), jnp.float32)
    w_out = 0.2 * jax.random.normal(ks[4], (output_dim, hidden_dim), jnp.float32)
    b_out = 0.1 * jax.random.normal(ks[5], (output_dim,), jnp.float32)

    questions = jax.random.randint(ks[6], (batch, seq_len), 0, output_dim)
    features = jax.random.randint(ks[7], (batch, seq_len), 0, feature_dim)
    # Trailing -1 padding (variable-length sequences); at least one sequence is
    # full length so pad_packed's max-length output equals seq_len.
    # TODO(synk): pad_packed_sequence truncates the time axis to max(lengths);
    # that dynamic truncation is not reproduced when every sequence is shorter
    # than seq_len (and non-trailing padding is not supported).
    lens = jnp.array([seq_len, seq_len - 2, seq_len - 3, seq_len], jnp.int32)
    pad = jnp.arange(seq_len)[None, :] >= lens[:, None]
    questions = jnp.where(pad, -1, questions)
    features = jnp.where(pad, -1, features)

    pred = dkt_forward(features, questions, w_ih, w_hh, b_ih, b_hh, w_out, b_out,
                       feature_dim=feature_dim, hidden_dim=hidden_dim,
                       output_dim=output_dim)
    pred = jax.block_until_ready(pred)

    ref = _reference(features, questions, w_ih, w_hh, b_ih, b_hh, w_out, b_out,
                     feature_dim=feature_dim, hidden_dim=hidden_dim,
                     output_dim=output_dim)
    assert pred.shape == (batch, seq_len - 1)
    # Tolerance sized for DEFAULT (single-pass bf16) MXU precision on both the
    # kernel and the XLA reference, per the perf review.
    assert jnp.allclose(pred, ref, atol=2e-2, rtol=2e-2), "mismatch vs reference"
    print("KERNEL_OK")
</pallas_src>

<mosaic_0001>
module attributes {stable_mosaic.version = 11 : i64} {
  func.func @_dkt_kernel(%arg0: i32, %arg1: memref<1x64x1xi32, #tpu.memory_space<vmem>>, %arg2: memref<32x128xf32, #tpu.memory_space<vmem>>, %arg3: memref<32x128xf32, #tpu.memory_space<vmem>>, %arg4: memref<1x128xf32, #tpu.memory_space<vmem>>, %arg5: memref<32x128xf32, #tpu.memory_space<vmem>>, %arg6: memref<1x128xf32, #tpu.memory_space<vmem>>, %arg7: memref<1x56x128xf32, #tpu.memory_space<vmem>>) attributes {dimension_semantics = [#tpu.dimension_semantics<parallel>], iteration_bounds = array<i64: 1>, scalar_prefetch = 0 : i64, scratch_operands = 0 : i64, tpu.core_type = #tpu.core_type<tc>, window_params = [{transform_indices = @transform_0, window_bounds = array<i64: 1, 64, 1>}, {pipeline_mode = #tpu.pipeline_mode<synchronous>, transform_indices = @transform_1, window_bounds = array<i64: 32, 128>}, {pipeline_mode = #tpu.pipeline_mode<synchronous>, transform_indices = @transform_2, window_bounds = array<i64: 32, 128>}, {pipeline_mode = #tpu.pipeline_mode<synchronous>, transform_indices = @transform_3, window_bounds = array<i64: 1, 128>}, {pipeline_mode = #tpu.pipeline_mode<synchronous>, transform_indices = @transform_4, window_bounds = array<i64: 32, 128>}, {pipeline_mode = #tpu.pipeline_mode<synchronous>, transform_indices = @transform_5, window_bounds = array<i64: 1, 128>}, {transform_indices = @transform_6, window_bounds = array<i64: 1, 56, 128>}]} {
    %c0 = arith.constant 0 : index
    %c0_0 = arith.constant 0 : index
    %c0_1 = arith.constant 0 : index
    %0 = vector.load %arg1[%c0, %c0_0, %c0_1] : memref<1x64x1xi32, #tpu.memory_space<vmem>>, vector<1x64x1xi32>
    %1 = vector.shape_cast %0 : vector<1x64x1xi32> to vector<64x1xi32>
    %2 = tpu.iota {dimensions = array<i32: 1>} : vector<64x32xi32>
    %3 = vector.broadcast %1 : vector<64x1xi32> to vector<64x32xi32>
    %4 = arith.cmpi eq, %3, %2 : vector<64x32xi32>
    %cst = arith.constant 1.000000e+00 : f32
    %cst_2 = arith.constant 0.000000e+00 : f32
    %5 = vector.broadcast %cst : f32 to vector<64x32xf32>
    %6 = vector.broadcast %cst_2 : f32 to vector<64x32xf32>
    %7 = arith.select %4, %5, %6 : vector<64x32xi1>, vector<64x32xf32>
    %c0_3 = arith.constant 0 : index
    %c0_4 = arith.constant 0 : index
    %8 = vector.load %arg2[%c0_3, %c0_4] : memref<32x128xf32, #tpu.memory_space<vmem>>, vector<32x128xf32>
    %cst_5 = arith.constant dense<0.000000e+00> : vector<64x128xf32>
    %9 = tpu.matmul %7, %8, %cst_5 {dimension_numbers = #tpu.dot_dimension_numbers<[1], [0], [0], [1], [0, 0, 1, 1], [], []>} : vector<64x32xf32>, vector<32x128xf32>, vector<64x128xf32> -> vector<64x128xf32>
    %c0_6 = arith.constant 0 : index
    %c0_7 = arith.constant 0 : index
    %10 = vector.load %arg4[%c0_6, %c0_7] : memref<1x128xf32, #tpu.memory_space<vmem>>, vector<1x128xf32>
    %11 = vector.broadcast %10 : vector<1x128xf32> to vector<64x128xf32>
    %12 = arith.addf %9, %11 : vector<64x128xf32>
    %c0_8 = arith.constant 0 : index
    %c0_9 = arith.constant 0 : index
    %13 = vector.load %arg3[%c0_8, %c0_9] : memref<32x128xf32, #tpu.memory_space<vmem>>, vector<32x128xf32>
    %14 = tpu.iota {dimensions = array<i32: 1>} : vector<1x128xi32>
    %c64_i32 = arith.constant 64 : i32
    %15 = vector.broadcast %c64_i32 : i32 to vector<1x128xi32>
    %16 = arith.cmpi sge, %14, %15 : vector<1x128xi32>
    %c96_i32 = arith.constant 96 : i32
    %17 = vector.broadcast %c96_i32 : i32 to vector<1x128xi32>
    %18 = arith.cmpi slt, %14, %17 : vector<1x128xi32>
    %19 = arith.andi %16, %18 : vector<1x128xi1>
    %cst_10 = arith.constant 1.000000e+00 : f32
    %cst_11 = arith.constant 5.000000e-01 : f32
    %20 = vector.broadcast %cst_10 : f32 to vector<1x128xf32>
    %21 = vector.broadcast %cst_11 : f32 to vector<1x128xf32>
    %22 = arith.select %19, %20, %21 : vector<1x128xi1>, vector<1x128xf32>
    %cst_12 = arith.constant 0.000000e+00 : f32
    %cst_13 = arith.constant 5.000000e-01 : f32
    %23 = vector.broadcast %cst_12 : f32 to vector<1x128xf32>
    %24 = vector.broadcast %cst_13 : f32 to vector<1x128xf32>
    %25 = arith.select %19, %23, %24 : vector<1x128xi1>, vector<1x128xf32>
    %cst_14 = arith.constant 0.000000e+00 : f32
    %26 = vector.broadcast %cst_14 : f32 to vector<8x32xf32>
    %cst_15 = arith.constant 0.000000e+00 : f32
    %27 = vector.broadcast %cst_15 : f32 to vector<8x32xf32>
    %28 = vector.extract_strided_slice %12 {offsets = [0, 0], sizes = [8, 128], strides = [1, 1]} : vector<64x128xf32> to vector<8x128xf32>
    %cst_16 = arith.constant dense<0.000000e+00> : vector<8x128xf32>
    %29 = tpu.matmul %26, %13, %cst_16 {dimension_numbers = #tpu.dot_dimension_numbers<[1], [0], [0], [1], [0, 0, 1, 1], [], []>} : vector<8x32xf32>, vector<32x128xf32>, vector<8x128xf32> -> vector<8x128xf32>
    %30 = arith.addf %28, %29 : vector<8x128xf32>
    %31 = vector.broadcast %22 : vector<1x128xf32> to vector<8x128xf32>
    %32 = arith.mulf %31, %30 : vector<8x128xf32>
    %33 = math.tanh %32 : vector<8x128xf32>
    %34 = vector.broadcast %22 : vector<1x128xf32> to vector<8x128xf32>
    %35 = arith.mulf %34, %33 : vector<8x128xf32>
    %36 = vector.broadcast %25 : vector<1x128xf32> to vector<8x128xf32>
    %37 = arith.addf %35, %36 : vector<8x128xf32>
    %38 = vector.extract_strided_slice %37 {offsets = [0, 0], sizes = [8, 32], strides = [1, 1]} : vector<8x128xf32> to vector<8x32xf32>
    %39 = vector.extract_strided_slice %37 {offsets = [0, 32], sizes = [8, 32], strides = [1, 1]} : vector<8x128xf32> to vector<8x32xf32>
    %40 = vector.extract_strided_slice %37 {offsets = [0, 64], sizes = [8, 32], strides = [1, 1]} : vector<8x128xf32> to vector<8x32xf32>
    %41 = vector.extract_strided_slice %37 {offsets = [0, 96], sizes = [8, 32], strides = [1, 1]} : vector<8x128xf32> to vector<8x32xf32>
    %42 = arith.mulf %39, %27 : vector<8x32xf32>
    %43 = arith.mulf %38, %40 : vector<8x32xf32>
    %44 = arith.addf %42, %43 : vector<8x32xf32>
    %45 = math.tanh %44 : vector<8x32xf32>
    %46 = arith.mulf %41, %45 : vector<8x32xf32>
    %47 = vector.extract_strided_slice %12 {offsets = [8, 0], sizes = [8, 128], strides = [1, 1]} : vector<64x128xf32> to vector<8x128xf32>
    %cst_17 = arith.constant dense<0.000000e+00> : vector<8x128xf32>
    %48 = tpu.matmul %46, %13, %cst_17 {dimension_numbers = #tpu.dot_dimension_numbers<[1], [0], [0], [1], [0, 0, 1, 1], [], []>} : vector<8x32xf32>, vector<32x128xf32>, vector<8x128xf32> -> vector<8x128xf32>
    %49 = arith.addf %47, %48 : vector<8x128xf32>
    %50 = vector.broadcast %22 : vector<1x128xf32> to vector<8x128xf32>
    %51 = arith.mulf %50, %49 : vector<8x128xf32>
    %52 = math.tanh %51 : vector<8x128xf32>
    %53 = vector.broadcast %22 : vector<1x128xf32> to vector<8x128xf32>
    %54 = arith.mulf %53, %52 : vector<8x128xf32>
    %55 = vector.broadcast %25 : vector<1x128xf32> to vector<8x128xf32>
    %56 = arith.addf %54, %55 : vector<8x128xf32>
    %57 = vector.extract_strided_slice %56 {offsets = [0, 0], sizes = [8, 32], strides = [1, 1]} : vector<8x128xf32> to vector<8x32xf32>
    %58 = vector.extract_strided_slice %56 {offsets = [0, 32], sizes = [8, 32], strides = [1, 1]} : vector<8x128xf32> to vector<8x32xf32>
    %59 = vector.extract_strided_slice %56 {offsets = [0, 64], sizes = [8, 32], strides = [1, 1]} : vector<8x128xf32> to vector<8x32xf32>
    %60 = vector.extract_strided_slice %56 {offsets = [0, 96], sizes = [8, 32], strides = [1, 1]} : vector<8x128xf32> to vector<8x32xf32>
    %61 = arith.mulf %58, %44 : vector<8x32xf32>
    %62 = arith.mulf %57, %59 : vector<8x32xf32>
    %63 = arith.addf %61, %62 : vector<8x32xf32>
    %64 = math.tanh %63 : vector<8x32xf32>
    %65 = arith.mulf %60, %64 : vector<8x32xf32>
    %66 = vector.extract_strided_slice %12 {offsets = [16, 0], sizes = [8, 128], strides = [1, 1]} : vector<64x128xf32> to vector<8x128xf32>
    %cst_18 = arith.constant dense<0.000000e+00> : vector<8x128xf32>
    %67 = tpu.matmul %65, %13, %cst_18 {dimension_numbers = #tpu.dot_dimension_numbers<[1], [0], [0], [1], [0, 0, 1, 1], [], []>} : vector<8x32xf32>, vector<32x128xf32>, vector<8x128xf32> -> vector<8x128xf32>
    %68 = arith.addf %66, %67 : vector<8x128xf32>
    %69 = vector.broadcast %22 : vector<1x128xf32> to vector<8x128xf32>
    %70 = arith.mulf %69, %68 : vector<8x128xf32>
    %71 = math.tanh %70 : vector<8x128xf32>
    %72 = vector.broadcast %22 : vector<1x128xf32> to vector<8x128xf32>
    %73 = arith.mulf %72, %71 : vector<8x128xf32>
    %74 = vector.broadcast %25 : vector<1x128xf32> to vector<8x128xf32>
    %75 = arith.addf %73, %74 : vector<8x128xf32>
    %76 = vector.extract_strided_slice %75 {offsets = [0, 0], sizes = [8, 32], strides = [1, 1]} : vector<8x128xf32> to vector<8x32xf32>
    %77 = vector.extract_strided_slice %75 {offsets = [0, 32], sizes = [8, 32], strides = [1, 1]} : vector<8x128xf32> to vector<8x32xf32>
    %78 = vector.extract_strided_slice %75 {offsets = [0, 64], sizes = [8, 32], strides = [1, 1]} : vector<8x128xf32> to vector<8x32xf32>
    %79 = vector.extract_strided_slice %75 {offsets = [0, 96], sizes = [8, 32], strides = [1, 1]} : vector<8x128xf32> to vector<8x32xf32>
    %80 = arith.mulf %77, %63 : vector<8x32xf32>
    %81 = arith.mulf %76, %78 : vector<8x32xf32>
    %82 = arith.addf %80, %81 : vector<8x32xf32>
    %83 = math.tanh %82 : vector<8x32xf32>
    %84 = arith.mulf %79, %83 : vector<8x32xf32>
    %85 = vector.extract_strided_slice %12 {offsets = [24, 0], sizes = [8, 128], strides = [1, 1]} : vector<64x128xf32> to vector<8x128xf32>
    %cst_19 = arith.constant dense<0.000000e+00> : vector<8x128xf32>
    %86 = tpu.matmul %84, %13, %cst_19 {dimension_numbers = #tpu.dot_dimension_numbers<[1], [0], [0], [1], [0, 0, 1, 1], [], []>} : vector<8x32xf32>, vector<32x128xf32>, vector<8x128xf32> -> vector<8x128xf32>
    %87 = arith.addf %85, %86 : vector<8x128xf32>
    %88 = vector.broadcast %22 : vector<1x128xf32> to vector<8x128xf32>
    %89 = arith.mulf %88, %87 : vector<8x128xf32>
    %90 = math.tanh %89 : vector<8x128xf32>
    %91 = vector.broadcast %22 : vector<1x128xf32> to vector<8x128xf32>
    %92 = arith.mulf %91, %90 : vector<8x128xf32>
    %93 = vector.broadcast %25 : vector<1x128xf32> to vector<8x128xf32>
    %94 = arith.addf %92, %93 : vector<8x128xf32>
    %95 = vector.extract_strided_slice %94 {offsets = [0, 0], sizes = [8, 32], strides = [1, 1]} : vector<8x128xf32> to vector<8x32xf32>
    %96 = vector.extract_strided_slice %94 {offsets = [0, 32], sizes = [8, 32], strides = [1, 1]} : vector<8x128xf32> to vector<8x32xf32>
    %97 = vector.extract_strided_slice %94 {offsets = [0, 64], sizes = [8, 32], strides = [1, 1]} : vector<8x128xf32> to vector<8x32xf32>
    %98 = vector.extract_strided_slice %94 {offsets = [0, 96], sizes = [8, 32], strides = [1, 1]} : vector<8x128xf32> to vector<8x32xf32>
    %99 = arith.mulf %96, %82 : vector<8x32xf32>
    %100 = arith.mulf %95, %97 : vector<8x32xf32>
    %101 = arith.addf %99, %100 : vector<8x32xf32>
    %102 = math.tanh %101 : vector<8x32xf32>
    %103 = arith.mulf %98, %102 : vector<8x32xf32>
    %104 = vector.extract_strided_slice %12 {offsets = [32, 0], sizes = [8, 128], strides = [1, 1]} : vector<64x128xf32> to vector<8x128xf32>
    %cst_20 = arith.constant dense<0.000000e+00> : vector<8x128xf32>
    %105 = tpu.matmul %103, %13, %cst_20 {dimension_numbers = #tpu.dot_dimension_numbers<[1], [0], [0], [1], [0, 0, 1, 1], [], []>} : vector<8x32xf32>, vector<32x128xf32>, vector<8x128xf32> -> vector<8x128xf32>
    %106 = arith.addf %104, %105 : vector<8x128xf32>
    %107 = vector.broadcast %22 : vector<1x128xf32> to vector<8x128xf32>
    %108 = arith.mulf %107, %106 : vector<8x128xf32>
    %109 = math.tanh %108 : vector<8x128xf32>
    %110 = vector.broadcast %22 : vector<1x128xf32> to vector<8x128xf32>
    %111 = arith.mulf %110, %109 : vector<8x128xf32>
    %112 = vector.broadcast %25 : vector<1x128xf32> to vector<8x128xf32>
    %113 = arith.addf %111, %112 : vector<8x128xf32>
    %114 = vector.extract_strided_slice %113 {offsets = [0, 0], sizes = [8, 32], strides = [1, 1]} : vector<8x128xf32> to vector<8x32xf32>
    %115 = vector.extract_strided_slice %113 {offsets = [0, 32], sizes = [8, 32], strides = [1, 1]} : vector<8x128xf32> to vector<8x32xf32>
    %116 = vector.extract_strided_slice %113 {offsets = [0, 64], sizes = [8, 32], strides = [1, 1]} : vector<8x128xf32> to vector<8x32xf32>
    %117 = vector.extract_strided_slice %113 {offsets = [0, 96], sizes = [8, 32], strides = [1, 1]} : vector<8x128xf32> to vector<8x32xf32>
    %118 = arith.mulf %115, %101 : vector<8x32xf32>
    %119 = arith.mulf %114, %116 : vector<8x32xf32>
    %120 = arith.addf %118, %119 : vector<8x32xf32>
    %121 = math.tanh %120 : vector<8x32xf32>
    %122 = arith.mulf %117, %121 : vector<8x32xf32>
    %123 = vector.extract_strided_slice %12 {offsets = [40, 0], sizes = [8, 128], strides = [1, 1]} : vector<64x128xf32> to vector<8x128xf32>
    %cst_21 = arith.constant dense<0.000000e+00> : vector<8x128xf32>
    %124 = tpu.matmul %122, %13, %cst_21 {dimension_numbers = #tpu.dot_dimension_numbers<[1], [0], [0], [1], [0, 0, 1, 1], [], []>} : vector<8x32xf32>, vector<32x128xf32>, vector<8x128xf32> -> vector<8x128xf32>
    %125 = arith.addf %123, %124 : vector<8x128xf32>
    %126 = vector.broadcast %22 : vector<1x128xf32> to vector<8x128xf32>
    %127 = arith.mulf %126, %125 : vector<8x128xf32>
    %128 = math.tanh %127 : vector<8x128xf32>
    %129 = vector.broadcast %22 : vector<1x128xf32> to vector<8x128xf32>
    %130 = arith.mulf %129, %128 : vector<8x128xf32>
    %131 = vector.broadcast %25 : vector<1x128xf32> to vector<8x128xf32>
    %132 = arith.addf %130, %131 : vector<8x128xf32>
    %133 = vector.extract_strided_slice %132 {offsets = [0, 0], sizes = [8, 32], strides = [1, 1]} : vector<8x128xf32> to vector<8x32xf32>
    %134 = vector.extract_strided_slice %132 {offsets = [0, 32], sizes = [8, 32], strides = [1, 1]} : vector<8x128xf32> to vector<8x32xf32>
    %135 = vector.extract_strided_slice %132 {offsets = [0, 64], sizes = [8, 32], strides = [1, 1]} : vector<8x128xf32> to vector<8x32xf32>
    %136 = vector.extract_strided_slice %132 {offsets = [0, 96], sizes = [8, 32], strides = [1, 1]} : vector<8x128xf32> to vector<8x32xf32>
    %137 = arith.mulf %134, %120 : vector<8x32xf32>
    %138 = arith.mulf %133, %135 : vector<8x32xf32>
    %139 = arith.addf %137, %138 : vector<8x32xf32>
    %140 = math.tanh %139 : vector<8x32xf32>
    %141 = arith.mulf %136, %140 : vector<8x32xf32>
    %142 = vector.extract_strided_slice %12 {offsets = [48, 0], sizes = [8, 128], strides = [1, 1]} : vector<64x128xf32> to vector<8x128xf32>
    %cst_22 = arith.constant dense<0.000000e+00> : vector<8x128xf32>
    %143 = tpu.matmul %141, %13, %cst_22 {dimension_numbers = #tpu.dot_dimension_numbers<[1], [0], [0], [1], [0, 0, 1, 1], [], []>} : vector<8x32xf32>, vector<32x128xf32>, vector<8x128xf32> -> vector<8x128xf32>
    %144 = arith.addf %142, %143 : vector<8x128xf32>
    %145 = vector.broadcast %22 : vector<1x128xf32> to vector<8x128xf32>
    %146 = arith.mulf %145, %144 : vector<8x128xf32>
    %147 = math.tanh %146 : vector<8x128xf32>
    %148 = vector.broadcast %22 : vector<1x128xf32> to vector<8x128xf32>
    %149 = arith.mulf %148, %147 : vector<8x128xf32>
    %150 = vector.broadcast %25 : vector<1x128xf32> to vector<8x128xf32>
    %151 = arith.addf %149, %150 : vector<8x128xf32>
    %152 = vector.extract_strided_slice %151 {offsets = [0, 0], sizes = [8, 32], strides = [1, 1]} : vector<8x128xf32> to vector<8x32xf32>
    %153 = vector.extract_strided_slice %151 {offsets = [0, 32], sizes = [8, 32], strides = [1, 1]} : vector<8x128xf32> to vector<8x32xf32>
    %154 = vector.extract_strided_slice %151 {offsets = [0, 64], sizes = [8, 32], strides = [1, 1]} : vector<8x128xf32> to vector<8x32xf32>
    %155 = vector.extract_strided_slice %151 {offsets = [0, 96], sizes = [8, 32], strides = [1, 1]} : vector<8x128xf32> to vector<8x32xf32>
    %156 = arith.mulf %153, %139 : vector<8x32xf32>
    %157 = arith.mulf %152, %154 : vector<8x32xf32>
    %158 = arith.addf %156, %157 : vector<8x32xf32>
    %159 = math.tanh %158 : vector<8x32xf32>
    %160 = arith.mulf %155, %159 : vector<8x32xf32>
    %c0_23 = arith.constant 0 : index
    %c0_24 = arith.constant 0 : index
    %161 = vector.load %arg5[%c0_23, %c0_24] : memref<32x128xf32, #tpu.memory_space<vmem>>, vector<32x128xf32>
    %c0_25 = arith.constant 0 : index
    %c0_26 = arith.constant 0 : index
    %162 = vector.load %arg6[%c0_25, %c0_26] : memref<1x128xf32, #tpu.memory_space<vmem>>, vector<1x128xf32>
    %cst_27 = arith.constant dense<0.000000e+00> : vector<8x128xf32>
    %163 = tpu.matmul %46, %161, %cst_27 {dimension_numbers = #tpu.dot_dimension_numbers<[1], [0], [0], [1], [0, 0, 1, 1], [], []>} : vector<8x32xf32>, vector<32x128xf32>, vector<8x128xf32> -> vector<8x128xf32>
    %164 = vector.broadcast %162 : vector<1x128xf32> to vector<8x128xf32>
    %165 = arith.addf %163, %164 : vector<8x128xf32>
    %cst_28 = arith.constant 5.000000e-01 : f32
    %166 = vector.broadcast %cst_28 : f32 to vector<8x128xf32>
    %167 = arith.mulf %166, %165 : vector<8x128xf32>
    %168 = math.tanh %167 : vector<8x128xf32>
    %cst_29 = arith.constant 5.000000e-01 : f32
    %169 = vector.broadcast %cst_29 : f32 to vector<8x128xf32>
    %170 = arith.mulf %169, %168 : vector<8x128xf32>
    %cst_30 = arith.constant 5.000000e-01 : f32
    %171 = vector.broadcast %cst_30 : f32 to vector<8x128xf32>
    %172 = arith.addf %170, %171 : vector<8x128xf32>
    %c0_31 = arith.constant 0 : index
    %c0_32 = arith.constant 0 : index
    %c0_33 = arith.constant 0 : index
    %173 = vector.load %arg7[%c0_31, %c0_32, %c0_33] : memref<1x56x128xf32, #tpu.memory_space<vmem>>, vector<1x8x128xf32>
    %174 = vector.shape_cast %173 : vector<1x8x128xf32> to vector<8x128xf32>
    %175 = vector.shape_cast %172 : vector<8x128xf32> to vector<1x8x128xf32>
    tpu.vector_store %arg7[%c0_31, %c0_32, %c0_33], %175 {strides = array<i32>} : memref<1x56x128xf32, #tpu.memory_space<vmem>>, vector<1x8x128xf32>,
    %cst_34 = arith.constant dense<0.000000e+00> : vector<8x128xf32>
    %176 = tpu.matmul %65, %161, %cst_34 {dimension_numbers = #tpu.dot_dimension_numbers<[1], [0], [0], [1], [0, 0, 1, 1], [], []>} : vector<8x32xf32>, vector<32x128xf32>, vector<8x128xf32> -> vector<8x128xf32>
    %177 = vector.broadcast %162 : vector<1x128xf32> to vector<8x128xf32>
    %178 = arith.addf %176, %177 : vector<8x128xf32>
    %cst_35 = arith.constant 5.000000e-01 : f32
    %179 = vector.broadcast %cst_35 : f32 to vector<8x128xf32>
    %180 = arith.mulf %179, %178 : vector<8x128xf32>
    %181 = math.tanh %180 : vector<8x128xf32>
    %cst_36 = arith.constant 5.000000e-01 : f32
    %182 = vector.broadcast %cst_36 : f32 to vector<8x128xf32>
    %183 = arith.mulf %182, %181 : vector<8x128xf32>
    %cst_37 = arith.constant 5.000000e-01 : f32
    %184 = vector.broadcast %cst_37 : f32 to vector<8x128xf32>
    %185 = arith.addf %183, %184 : vector<8x128xf32>
    %c0_38 = arith.constant 0 : index
    %c8 = arith.constant 8 : index
    %c0_39 = arith.constant 0 : index
    %186 = vector.load %arg7[%c0_38, %c8, %c0_39] : memref<1x56x128xf32, #tpu.memory_space<vmem>>, vector<1x8x128xf32>
    %187 = vector.shape_cast %186 : vector<1x8x128xf32> to vector<8x128xf32>
    %188 = vector.shape_cast %185 : vector<8x128xf32> to vector<1x8x128xf32>
    tpu.vector_store %arg7[%c0_38, %c8, %c0_39], %188 {strides = array<i32>} : memref<1x56x128xf32, #tpu.memory_space<vmem>>, vector<1x8x128xf32>,
    %cst_40 = arith.constant dense<0.000000e+00> : vector<8x128xf32>
    %189 = tpu.matmul %84, %161, %cst_40 {dimension_numbers = #tpu.dot_dimension_numbers<[1], [0], [0], [1], [0, 0, 1, 1], [], []>} : vector<8x32xf32>, vector<32x128xf32>, vector<8x128xf32> -> vector<8x128xf32>
    %190 = vector.broadcast %162 : vector<1x128xf32> to vector<8x128xf32>
    %191 = arith.addf %189, %190 : vector<8x128xf32>
    %cst_41 = arith.constant 5.000000e-01 : f32
    %192 = vector.broadcast %cst_41 : f32 to vector<8x128xf32>
    %193 = arith.mulf %192, %191 : vector<8x128xf32>
    %194 = math.tanh %193 : vector<8x128xf32>
    %cst_42 = arith.constant 5.000000e-01 : f32
    %195 = vector.broadcast %cst_42 : f32 to vector<8x128xf32>
    %196 = arith.mulf %195, %194 : vector<8x128xf32>
    %cst_43 = arith.constant 5.000000e-01 : f32
    %197 = vector.broadcast %cst_43 : f32 to vector<8x128xf32>
    %198 = arith.addf %196, %197 : vector<8x128xf32>
    %c0_44 = arith.constant 0 : index
    %c16 = arith.constant 16 : index
    %c0_45 = arith.constant 0 : index
    %199 = vector.load %arg7[%c0_44, %c16, %c0_45] : memref<1x56x128xf32, #tpu.memory_space<vmem>>, vector<1x8x128xf32>
    %200 = vector.shape_cast %199 : vector<1x8x128xf32> to vector<8x128xf32>
    %201 = vector.shape_cast %198 : vector<8x128xf32> to vector<1x8x128xf32>
    tpu.vector_store %arg7[%c0_44, %c16, %c0_45], %201 {strides = array<i32>} : memref<1x56x128xf32, #tpu.memory_space<vmem>>, vector<1x8x128xf32>,
    %cst_46 = arith.constant dense<0.000000e+00> : vector<8x128xf32>
    %202 = tpu.matmul %103, %161, %cst_46 {dimension_numbers = #tpu.dot_dimension_numbers<[1], [0], [0], [1], [0, 0, 1, 1], [], []>} : vector<8x32xf32>, vector<32x128xf32>, vector<8x128xf32> -> vector<8x128xf32>
    %203 = vector.broadcast %162 : vector<1x128xf32> to vector<8x128xf32>
    %204 = arith.addf %202, %203 : vector<8x128xf32>
    %cst_47 = arith.constant 5.000000e-01 : f32
    %205 = vector.broadcast %cst_47 : f32 to vector<8x128xf32>
    %206 = arith.mulf %205, %204 : vector<8x128xf32>
    %207 = math.tanh %206 : vector<8x128xf32>
    %cst_48 = arith.constant 5.000000e-01 : f32
    %208 = vector.broadcast %cst_48 : f32 to vector<8x128xf32>
    %209 = arith.mulf %208, %207 : vector<8x128xf32>
    %cst_49 = arith.constant 5.000000e-01 : f32
    %210 = vector.broadcast %cst_49 : f32 to vector<8x128xf32>
    %211 = arith.addf %209, %210 : vector<8x128xf32>
    %c0_50 = arith.constant 0 : index
    %c24 = arith.constant 24 : index
    %c0_51 = arith.constant 0 : index
    %212 = vector.load %arg7[%c0_50, %c24, %c0_51] : memref<1x56x128xf32, #tpu.memory_space<vmem>>, vector<1x8x128xf32>
    %213 = vector.shape_cast %212 : vector<1x8x128xf32> to vector<8x128xf32>
    %214 = vector.shape_cast %211 : vector<8x128xf32> to vector<1x8x128xf32>
    tpu.vector_store %arg7[%c0_50, %c24, %c0_51], %214 {strides = array<i32>} : memref<1x56x128xf32, #tpu.memory_space<vmem>>, vector<1x8x128xf32>,
    %cst_52 = arith.constant dense<0.000000e+00> : vector<8x128xf32>
    %215 = tpu.matmul %122, %161, %cst_52 {dimension_numbers = #tpu.dot_dimension_numbers<[1], [0], [0], [1], [0, 0, 1, 1], [], []>} : vector<8x32xf32>, vector<32x128xf32>, vector<8x128xf32> -> vector<8x128xf32>
    %216 = vector.broadcast %162 : vector<1x128xf32> to vector<8x128xf32>
    %217 = arith.addf %215, %216 : vector<8x128xf32>
    %cst_53 = arith.constant 5.000000e-01 : f32
    %218 = vector.broadcast %cst_53 : f32 to vector<8x128xf32>
    %219 = arith.mulf %218, %217 : vector<8x128xf32>
    %220 = math.tanh %219 : vector<8x128xf32>
    %cst_54 = arith.constant 5.000000e-01 : f32
    %221 = vector.broadcast %cst_54 : f32 to vector<8x128xf32>
    %222 = arith.mulf %221, %220 : vector<8x128xf32>
    %cst_55 = arith.constant 5.000000e-01 : f32
    %223 = vector.broadcast %cst_55 : f32 to vector<8x128xf32>
    %224 = arith.addf %222, %223 : vector<8x128xf32>
    %c0_56 = arith.constant 0 : index
    %c32 = arith.constant 32 : index
    %c0_57 = arith.constant 0 : index
    %225 = vector.load %arg7[%c0_56, %c32, %c0_57] : memref<1x56x128xf32, #tpu.memory_space<vmem>>, vector<1x8x128xf32>
    %226 = vector.shape_cast %225 : vector<1x8x128xf32> to vector<8x128xf32>
    %227 = vector.shape_cast %224 : vector<8x128xf32> to vector<1x8x128xf32>
    tpu.vector_store %arg7[%c0_56, %c32, %c0_57], %227 {strides = array<i32>} : memref<1x56x128xf32, #tpu.memory_space<vmem>>, vector<1x8x128xf32>,
    %cst_58 = arith.constant dense<0.000000e+00> : vector<8x128xf32>
    %228 = tpu.matmul %141, %161, %cst_58 {dimension_numbers = #tpu.dot_dimension_numbers<[1], [0], [0], [1], [0, 0, 1, 1], [], []>} : vector<8x32xf32>, vector<32x128xf32>, vector<8x128xf32> -> vector<8x128xf32>
    %229 = vector.broadcast %162 : vector<1x128xf32> to vector<8x128xf32>
    %230 = arith.addf %228, %229 : vector<8x128xf32>
    %cst_59 = arith.constant 5.000000e-01 : f32
    %231 = vector.broadcast %cst_59 : f32 to vector<8x128xf32>
    %232 = arith.mulf %231, %230 : vector<8x128xf32>
    %233 = math.tanh %232 : vector<8x128xf32>
    %cst_60 = arith.constant 5.000000e-01 : f32
    %234 = vector.broadcast %cst_60 : f32 to vector<8x128xf32>
    %235 = arith.mulf %234, %233 : vector<8x128xf32>
    %cst_61 = arith.constant 5.000000e-01 : f32
    %236 = vector.broadcast %cst_61 : f32 to vector<8x128xf32>
    %237 = arith.addf %235, %236 : vector<8x128xf32>
    %c0_62 = arith.constant 0 : index
    %c40 = arith.constant 40 : index
    %c0_63 = arith.constant 0 : index
    %238 = vector.load %arg7[%c0_62, %c40, %c0_63] : memref<1x56x128xf32, #tpu.memory_space<vmem>>, vector<1x8x128xf32>
    %239 = vector.shape_cast %238 : vector<1x8x128xf32> to vector<8x128xf32>
    %240 = vector.shape_cast %237 : vector<8x128xf32> to vector<1x8x128xf32>
    tpu.vector_store %arg7[%c0_62, %c40, %c0_63], %240 {strides = array<i32>} : memref<1x56x128xf32, #tpu.memory_space<vmem>>, vector<1x8x128xf32>,
    %cst_64 = arith.constant dense<0.000000e+00> : vector<8x128xf32>
    %241 = tpu.matmul %160, %161, %cst_64 {dimension_numbers = #tpu.dot_dimension_numbers<[1], [0], [0], [1], [0, 0, 1, 1], [], []>} : vector<8x32xf32>, vector<32x128xf32>, vector<8x128xf32> -> vector<8x128xf32>
    %242 = vector.broadcast %162 : vector<1x128xf32> to vector<8x128xf32>
    %243 = arith.addf %241, %242 : vector<8x128xf32>
    %cst_65 = arith.constant 5.000000e-01 : f32
    %244 = vector.broadcast %cst_65 : f32 to vector<8x128xf32>
    %245 = arith.mulf %244, %243 : vector<8x128xf32>
    %246 = math.tanh %245 : vector<8x128xf32>
    %cst_66 = arith.constant 5.000000e-01 : f32
    %247 = vector.broadcast %cst_66 : f32 to vector<8x128xf32>
    %248 = arith.mulf %247, %246 : vector<8x128xf32>
    %cst_67 = arith.constant 5.000000e-01 : f32
    %249 = vector.broadcast %cst_67 : f32 to vector<8x128xf32>
    %250 = arith.addf %248, %249 : vector<8x128xf32>
    %c0_68 = arith.constant 0 : index
    %c48 = arith.constant 48 : index
    %c0_69 = arith.constant 0 : index
    %251 = vector.load %arg7[%c0_68, %c48, %c0_69] : memref<1x56x128xf32, #tpu.memory_space<vmem>>, vector<1x8x128xf32>
    %252 = vector.shape_cast %251 : vector<1x8x128xf32> to vector<8x128xf32>
    %253 = vector.shape_cast %250 : vector<8x128xf32> to vector<1x8x128xf32>
    tpu.vector_store %arg7[%c0_68, %c48, %c0_69], %253 {strides = array<i32>} : memref<1x56x128xf32, #tpu.memory_space<vmem>>, vector<1x8x128xf32>,
    return
  }
  func.func @transform_0(%arg0: i32) -> (i32, i32, i32) {
    %c0_i32 = arith.constant 0 : i32
    %c0_i32_0 = arith.constant 0 : i32
    %c0_i32_1 = arith.constant 0 : i32
    return %arg0, %c0_i32, %c0_i32_0 : i32, i32, i32
  }
  func.func @transform_1(%arg0: i32) -> (i32, i32) {
    %c0_i32 = arith.constant 0 : i32
    %c0_i32_0 = arith.constant 0 : i32
    %c0_i32_1 = arith.constant 0 : i32
    return %c0_i32, %c0_i32_0 : i32, i32
  }
  func.func @transform_2(%arg0: i32) -> (i32, i32) {
    %c0_i32 = arith.constant 0 : i32
    %c0_i32_0 = arith.constant 0 : i32
    %c0_i32_1 = arith.constant 0 : i32
    return %c0_i32, %c0_i32_0 : i32, i32
  }
  func.func @transform_3(%arg0: i32) -> (i32, i32) {
    %c0_i32 = arith.constant 0 : i32
    %c0_i32_0 = arith.constant 0 : i32
    %c0_i32_1 = arith.constant 0 : i32
    return %c0_i32, %c0_i32_0 : i32, i32
  }
  func.func @transform_4(%arg0: i32) -> (i32, i32) {
    %c0_i32 = arith.constant 0 : i32
    %c0_i32_0 = arith.constant 0 : i32
    %c0_i32_1 = arith.constant 0 : i32
    return %c0_i32, %c0_i32_0 : i32, i32
  }
  func.func @transform_5(%arg0: i32) -> (i32, i32) {
    %c0_i32 = arith.constant 0 : i32
    %c0_i32_0 = arith.constant 0 : i32
    %c0_i32_1 = arith.constant 0 : i32
    return %c0_i32, %c0_i32_0 : i32, i32
  }
  func.func @transform_6(%arg0: i32) -> (i32, i32, i32) {
    %c0_i32 = arith.constant 0 : i32
    %c0_i32_0 = arith.constant 0 : i32
    %c0_i32_1 = arith.constant 0 : i32
    return %arg0, %c0_i32, %c0_i32_0 : i32, i32, i32
  }
}

</mosaic_0001>

<llo_original>
// kernel: tpu_custom_call.1
$region0: #{tpu_custom_call.1}
  #allocation0 [shape = 'u32[]', space=smem, size = 0x4, offset = 0x4, fixed_abs, tag = 'smem constant byte address 0x4 - core index']
  #allocation1 [shape = 'u32[144,128]{1,0:T(1,128)}', space=vmem, size = 0x12000, scoped, tag = 'internal scratch']
  %s0 = inlined_call_operand.vmem [shape: s32[1,64,1], index: 0, kind: input, shape index: {}]
  %s1 = inlined_call_operand.vmem [shape: f32[32,128], index: 1, kind: input, shape index: {}]
  %s2 = inlined_call_operand.vmem [shape: f32[32,128], index: 2, kind: input, shape index: {}]
  %s3 = inlined_call_operand.vmem [shape: f32[1,128], index: 3, kind: input, shape index: {}]
  %s4 = inlined_call_operand.hbm [shape: f32[32,128], index: 4, kind: input, shape index: {}]
  %s5 = inlined_call_operand.vmem [shape: f32[1,128], index: 5, kind: input, shape index: {}]
  %s6 = inlined_call_operand.hbm [shape: f32[1,56,128], index: 6, kind: output, shape index: {}]
  %s7 = sld [smem:[#allocation0]]
  $region38: #{tpu_custom_call.1} parent=0
    _
  %s9 = ssub.s32 1, %s7
  %s10 = scalar_select 0, %s9, %s7
  $region1: #{tpu_custom_call.1} parent=0
    #allocation2 [shape = 'u8[16384]{0}', space=vmem, size = 0x4000, scoped, tag = 'input window, operand 4, single buffered']
    #allocation3 [shape = 's32[1]{0}', space=sflag, size = 0x4, scoped, tag = 'scoped memory for tpu_custom_call.1']
    #allocation4 [shape = 's32[1]{0}', space=sflag, size = 0x4, scoped, tag = 'scoped memory for tpu_custom_call.1']
    #allocation5 [shape = 'u8[28672]{0}', space=vmem, size = 0x7000, scoped, tag = 'output window, operand 0, single buffered']
    %11 = vsyncpa [#allocation3], 0
    %12 = vsyncpa [#allocation4], 0
    // Predicated region
    $region2: #{tpu_custom_call.1} parent=1 // pred_check
      _
    $region3: #{tpu_custom_call.1} parent=1 // pred_check_branch
      %14 = sbr.rel (0) target = $region5
    $region4: #{tpu_custom_call.1} parent=1 // pred_region
      _
    $region5: #{tpu_custom_call.1} parent=1 // pred_fallthru
      _
    // Predicated region
    $region6: #{tpu_custom_call.1} parent=1 // pred_check
      _
    $region7: #{tpu_custom_call.1} parent=1 // pred_check_branch
      %16 = sbr.rel (0) target = $region9
    $region8: #{tpu_custom_call.1} parent=1 // pred_region
      _
    $region9: #{tpu_custom_call.1} parent=1 // pred_fallthru
      _
    // Predicated region
    $region10: #{tpu_custom_call.1} parent=1 // pred_check
      _
    $region11: #{tpu_custom_call.1} parent=1 // pred_check_branch
      %18 = sbr.rel (0) target = $region13
    $region12: #{tpu_custom_call.1} parent=1 // pred_region
      _
    $region13: #{tpu_custom_call.1} parent=1 // pred_fallthru
      _
    // Predicated region
    $region14: #{tpu_custom_call.1} parent=1 // pred_check
      _
    $region15: #{tpu_custom_call.1} parent=1 // pred_check_branch
      %20 = sbr.rel (0) target = $region17
    $region16: #{tpu_custom_call.1} parent=1 // pred_region
      _
    $region17: #{tpu_custom_call.1} parent=1 // pred_fallthru
      _
    // Predicated region
    $region18: #{tpu_custom_call.1} parent=1 // pred_check
      _
    $region19: #{tpu_custom_call.1} parent=1 // pred_check_branch
      %22 = sbr.rel (0) target = $region21
    $region20: #{tpu_custom_call.1} parent=1 // pred_region
      %s24 = ssub.s32 512, 512
      %25 = vsyncadd [#allocation3], %s24
      %s26 = sshll.u32 [#allocation2], 4
      %s27 = int_to_ptr.vmem [resolvable:$true] %s26
      %32 = dma.hbm_to_vmem [thread:$0]  %s4, 512, %s27, [#allocation3], 128, 128, 8
    $region21: #{tpu_custom_call.1} parent=1 // pred_fallthru
      _
    // Predicated region
    $region22: #{tpu_custom_call.1} parent=1 // pred_check
      _
    $region23: #{tpu_custom_call.1} parent=1 // pred_check_branch
      %34 = sbr.rel (0) target = $region25
    $region24: #{tpu_custom_call.1} parent=1 // pred_region
      _
    $region25: #{tpu_custom_call.1} parent=1 // pred_fallthru
      _
    // Predicated region
    $region26: #{tpu_custom_call.1} parent=1 // pred_check
      _
    $region27: #{tpu_custom_call.1} parent=1 // pred_check_branch
      %36 = sbr.rel (0) target = $region29
    $region28: #{tpu_custom_call.1} parent=1 // pred_region
      %37 = dma.done [#allocation3], 512
    $region29: #{tpu_custom_call.1} parent=1 // pred_fallthru
      _
    %v38 = vld [vmem:[%s0] sm:$0xff]
    %v39 = vld [vmem:[%s0 + $0x8] sm:$0xff]
    %v40 = vld [vmem:[%s0 + $0x10] sm:$0xff]
    %v41 = vld [vmem:[%s0 + $0x18] sm:$0xff]
    %v42 = vld [vmem:[%s0 + $0x20] sm:$0xff]
    %v43 = vld [vmem:[%s0 + $0x28] sm:$0xff]
    %v44 = vld [vmem:[%s0 + $0x30] sm:$0xff]
    %v45 = vld [vmem:[%s0 + $0x38] sm:$0xff]
    %v46 = vlaneseq
    %v47 = vand.u32 %v46, 127
    %48 = vset.pattern.permute.xlu0 0
    %49 = vperm.xlu0 %48, %v38
    %v50 = vpop.permute.xlu0 %49
    %51 = vset.pattern.permute.xlu0 0
    %52 = vperm.xlu0 %51, %v39
    %v53 = vpop.permute.xlu0 %52
    %54 = vset.pattern.permute.xlu0 0
    %55 = vperm.xlu0 %54, %v40
    %v56 = vpop.permute.xlu0 %55
    %57 = vset.pattern.permute.xlu0 0
    %58 = vperm.xlu0 %57, %v41
    %v59 = vpop.permute.xlu0 %58
    %60 = vset.pattern.permute.xlu0 0
    %61 = vperm.xlu0 %60, %v42
    %v62 = vpop.permute.xlu0 %61
    %63 = vset.pattern.permute.xlu0 0
    %64 = vperm.xlu0 %63, %v43
    %v65 = vpop.permute.xlu0 %64
    %66 = vset.pattern.permute.xlu0 0
    %67 = vperm.xlu0 %66, %v44
    %v68 = vpop.permute.xlu0 %67
    %69 = vset.pattern.permute.xlu0 0
    %70 = vperm.xlu0 %69, %v45
    %v71 = vpop.permute.xlu0 %70
    %vm72 = vcmp.eq.s32.totalorder %v50, %v47
    %vm73 = vcmp.eq.s32.totalorder %v53, %v47
    %vm74 = vcmp.eq.s32.totalorder %v56, %v47
    %vm75 = vcmp.eq.s32.totalorder %v59, %v47
    %vm76 = vcmp.eq.s32.totalorder %v62, %v47
    %vm77 = vcmp.eq.s32.totalorder %v65, %v47
    %vm78 = vcmp.eq.s32.totalorder %v68, %v47
    %vm79 = vcmp.eq.s32.totalorder %v71, %v47
    %v80 = vsel %vm72, 1.0, 0.0
    %v81 = vsel %vm73, 1.0, 0.0
    %v82 = vsel %vm74, 1.0, 0.0
    %v83 = vsel %vm75, 1.0, 0.0
    %v84 = vsel %vm76, 1.0, 0.0
    %v85 = vsel %vm77, 1.0, 0.0
    %v86 = vsel %vm78, 1.0, 0.0
    %v87 = vsel %vm79, 1.0, 0.0
    %v88 = vld [vmem:[%s1] sm:$0xff]
    %v89 = vld [vmem:[%s1 + $0x8] sm:$0xff]
    %v90 = vld [vmem:[%s1 + $0x10] sm:$0xff]
    %v91 = vld [vmem:[%s1 + $0x18] sm:$0xff]
    %v92 = vld [vmem:[%s3] sm:$0x1]
    %v94 = vlaneseq
    %v95 = vshrl.u32 %v94, 7
    %v96 = vsub.s32 0, %v95
    %v97 = vrot.slane %v92, %v96
    %vm99 = vcmask 261120
    %v101 = vsel %vm99, %v80, 0
    %v104 = vsel %vm99, %v81, 0
    %v107 = vsel %vm99, %v82, 0
    %v110 = vsel %vm99, %v83, 0
    %v113 = vsel %vm99, %v84, 0
    %v116 = vsel %vm99, %v85, 0
    %v119 = vsel %vm99, %v86, 0
    %v122 = vsel %vm99, %v87, 0
    %124 = vmatprep.subr.mxu0 0.0
    %125 = vmatpush1.msra.mxu0 0.0
    %126 = vmatprep.subr.mxu0 0.0
    %127 = vmatpush1.msra.mxu0 0.0
    %128 = vmatprep.subr.mxu0 0.0
    %129 = vmatpush1.msra.mxu0 0.0
    %130 = vmatprep.subr.mxu0 0.0
    %131 = vmatpush1.msra.mxu0 0.0
    %132 = vmatprep.subr.mxu0 0.0
    %133 = vmatpush1.msra.mxu0 0.0
    %134 = vmatprep.subr.mxu0 0.0
    %135 = vmatpush1.msra.mxu0 0.0
    %136 = vmatprep.subr.mxu0 0.0
    %137 = vmatpush1.msra.mxu0 0.0
    %138 = vmatprep.subr.mxu0 0.0
    %139 = vmatpush1.msra.mxu0 0.0
    %140 = vmatprep.subr.mxu0 0.0
    %141 = vmatpush1.msra.mxu0 0.0
    %142 = vmatprep.subr.mxu0 0.0
    %143 = vmatpush1.msra.mxu0 0.0
    %144 = vmatprep.subr.mxu0 0.0
    %145 = vmatpush1.msra.mxu0 0.0
    %146 = vmatprep.subr.mxu0 0.0
    %147 = vmatpush1.msra.mxu0 0.0
    %148 = vmatprep.subr.mxu0 0.0
    %149 = vmatpush1.msra.mxu0 %v91
    %150 = vmatprep.subr.mxu0 0.0
    %151 = vmatpush1.msra.mxu0 %v90
    %152 = vmatprep.subr.mxu0 0.0
    %153 = vmatpush1.msra.mxu0 %v89
    %154 = vmatprep.subr.mxu0 0.0
    %155 = vmatpush1.msra.mxu0 %v88
    %156 = vmatprep.subr.mxu0 0.0
    %157 = vmatpush2.msra.mxu0 0.0
    %158 = vmatprep.subr.mxu0 0.0
    %159 = vmatpush2.msra.mxu0 0.0
    %160 = vmatprep.subr.mxu0 0.0
    %161 = vmatpush2.msra.mxu0 0.0
    %162 = vmatprep.subr.mxu0 0.0
    %163 = vmatpush2.msra.mxu0 0.0
    %164 = vmatprep.subr.mxu0 0.0
    %165 = vmatpush2.msra.mxu0 0.0
    %166 = vmatprep.subr.mxu0 0.0
    %167 = vmatpush2.msra.mxu0 0.0
    %168 = vmatprep.subr.mxu0 0.0
    %169 = vmatpush2.msra.mxu0 0.0
    %170 = vmatprep.subr.mxu0 0.0
    %171 = vmatpush2.msra.mxu0 0.0
    %172 = vmatprep.subr.mxu0 0.0
    %173 = vmatpush2.msra.mxu0 0.0
    %174 = vmatprep.subr.mxu0 0.0
    %175 = vmatpush2.msra.mxu0 0.0
    %176 = vmatprep.subr.mxu0 0.0
    %177 = vmatpush2.msra.mxu0 0.0
    %178 = vmatprep.subr.mxu0 0.0
    %179 = vmatpush2.msra.mxu0 0.0
    %180 = vmatprep.subr.mxu0 0.0
    %181 = vmatpush2.msra.mxu0 0.0
    %182 = vmatprep.subr.mxu0 0.0
    %183 = vmatpush2.msra.mxu0 0.0
    %184 = vmatprep.subr.mxu0 0.0
    %185 = vmatpush2.msra.mxu0 0.0
    %186 = vmatprep.subr.mxu0 0.0
    %187 = vmatpush2.msra.mxu0 0.0
    %188 = vmatprep.mubr.f32.mxu0 0.0
    %189 = vmatmul.mubr.f32.gmra.mxu0 %v101
    %v190 = vpop.f32.mrf.mxu0
    %v191 = vadd.f32 %v97, %v190
    %v192 = vpop.f32.mrf.mxu0
    %193 = vmatprep.mubr.f32.mxu0 0.0
    %194 = vmatmul.mubr.f32.gmra.mxu0 %v104
    %v195 = vpop.f32.mrf.mxu0
    %v196 = vadd.f32 %v97, %v195
    %v197 = vpop.f32.mrf.mxu0
    %198 = vmatprep.mubr.f32.mxu0 0.0
    %199 = vmatmul.mubr.f32.gmra.mxu0 %v107
    %v200 = vpop.f32.mrf.mxu0
    %v201 = vadd.f32 %v97, %v200
    %v202 = vpop.f32.mrf.mxu0
    %203 = vmatprep.mubr.f32.mxu0 0.0
    %204 = vmatmul.mubr.f32.gmra.mxu0 %v110
    %v205 = vpop.f32.mrf.mxu0
    %v206 = vadd.f32 %v97, %v205
    %v207 = vpop.f32.mrf.mxu0
    %208 = vmatprep.mubr.f32.mxu0 0.0
    %209 = vmatmul.mubr.f32.gmra.mxu0 %v113
    %v210 = vpop.f32.mrf.mxu0
    %v211 = vadd.f32 %v97, %v210
    %v212 = vpop.f32.mrf.mxu0
    %213 = vmatprep.mubr.f32.mxu0 0.0
    %214 = vmatmul.mubr.f32.gmra.mxu0 %v116
    %v215 = vpop.f32.mrf.mxu0
    %v216 = vadd.f32 %v97, %v215
    %v217 = vpop.f32.mrf.mxu0
    %218 = vmatprep.mubr.f32.mxu0 0.0
    %219 = vmatmul.mubr.f32.gmra.mxu0 %v119
    %v220 = vpop.f32.mrf.mxu0
    %v221 = vadd.f32 %v97, %v220
    %v222 = vpop.f32.mrf.mxu0
    %223 = vmatprep.mubr.f32.mxu0 0.0
    %224 = vmatmul.mubr.f32.gmra.mxu0 %v122
    %v225 = vpop.f32.mrf.mxu0
    %v226 = vpop.f32.mrf.mxu0
    %227 = vdwg.mxu0
    %v228 = vld [vmem:[%s2] sm:$0xff]
    %v229 = vld [vmem:[%s2 + $0x8] sm:$0xff]
    %v230 = vld [vmem:[%s2 + $0x10] sm:$0xff]
    %v231 = vld [vmem:[%s2 + $0x18] sm:$0xff]
    %vm232 = vcmp.ge.s32.totalorder %v47, 64
    %vm233 = vcmp.lt.s32.totalorder %v47, 96
    %vm234 = vmand %vm232, %vm233
    %v235 = vsel %vm234, 1.0, 0.5
    %v236 = vsel %vm234, 0.0, 0.5
    %v238 = vsel %vm99, 0.0, 0
    %240 = vmatprep.subr.mxu0 0.0
    %241 = vmatpush1.msra.mxu0 0.0
    %242 = vmatprep.subr.mxu0 0.0
    %243 = vmatpush1.msra.mxu0 0.0
    %244 = vmatprep.subr.mxu0 0.0
    %245 = vmatpush1.msra.mxu0 0.0
    %246 = vmatprep.subr.mxu0 0.0
    %247 = vmatpush1.msra.mxu0 0.0
    %248 = vmatprep.subr.mxu0 0.0
    %249 = vmatpush1.msra.mxu0 0.0
    %250 = vmatprep.subr.mxu0 0.0
    %251 = vmatpush1.msra.mxu0 0.0
    %252 = vmatprep.subr.mxu0 0.0
    %253 = vmatpush1.msra.mxu0 0.0
    %254 = vmatprep.subr.mxu0 0.0
    %255 = vmatpush1.msra.mxu0 0.0
    %256 = vmatprep.subr.mxu0 0.0
    %257 = vmatpush1.msra.mxu0 0.0
    %258 = vmatprep.subr.mxu0 0.0
    %259 = vmatpush1.msra.mxu0 0.0
    %260 = vmatprep.subr.mxu0 0.0
    %261 = vmatpush1.msra.mxu0 0.0
    %262 = vmatprep.subr.mxu0 0.0
    %263 = vmatpush1.msra.mxu0 0.0
    %264 = vmatprep.subr.mxu0 0.0
    %265 = vmatpush1.msra.mxu0 %v231
    %266 = vmatprep.subr.mxu0 0.0
    %267 = vmatpush1.msra.mxu0 %v230
    %268 = vmatprep.subr.mxu0 0.0
    %269 = vmatpush1.msra.mxu0 %v229
    %270 = vmatprep.subr.mxu0 0.0
    %271 = vmatpush1.msra.mxu0 %v228
    %272 = vmatprep.subr.mxu0 0.0
    %273 = vmatpush2.msra.mxu0 0.0
    %274 = vmatprep.subr.mxu0 0.0
    %275 = vmatpush2.msra.mxu0 0.0
    %276 = vmatprep.subr.mxu0 0.0
    %277 = vmatpush2.msra.mxu0 0.0
    %278 = vmatprep.subr.mxu0 0.0
    %279 = vmatpush2.msra.mxu0 0.0
    %280 = vmatprep.subr.mxu0 0.0
    %281 = vmatpush2.msra.mxu0 0.0
    %282 = vmatprep.subr.mxu0 0.0
    %283 = vmatpush2.msra.mxu0 0.0
    %284 = vmatprep.subr.mxu0 0.0
    %285 = vmatpush2.msra.mxu0 0.0
    %286 = vmatprep.subr.mxu0 0.0
    %287 = vmatpush2.msra.mxu0 0.0
    %288 = vmatprep.subr.mxu0 0.0
    %289 = vmatpush2.msra.mxu0 0.0
    %290 = vmatprep.subr.mxu0 0.0
    %291 = vmatpush2.msra.mxu0 0.0
    %292 = vmatprep.subr.mxu0 0.0
    %293 = vmatpush2.msra.mxu0 0.0
    %294 = vmatprep.subr.mxu0 0.0
    %295 = vmatpush2.msra.mxu0 0.0
    %296 = vmatprep.subr.mxu0 0.0
    %297 = vmatpush2.msra.mxu0 0.0
    %298 = vmatprep.subr.mxu0 0.0
    %299 = vmatpush2.msra.mxu0 0.0
    %300 = vmatprep.subr.mxu0 0.0
    %301 = vmatpush2.msra.mxu0 0.0
    %302 = vmatprep.subr.mxu0 0.0
    %303 = vmatpush2.msra.mxu0 0.0
    %304 = vmatprep.mubr.f32.mxu0 0.0
    %305 = vmatmul.mubr.f32.gmra.mxu0 %v238
    %v306 = vpop.f32.mrf.mxu0
    %v307 = vadd.f32 0.0, %v306
    %v308 = vpop.f32.mrf.mxu0
    %309 = vdwg.mxu0
    %v310 = vadd.f32 %v191, %v307
    %v311 = vmul.f32 %v235, %v310
    %v312 = vtanh.pop %v311
    %v313 = vmul.f32 %v235, %v312
    %v314 = vadd.f32 %v313, %v236
    %v315 = vmul.f32 %v314, 0.0
    %317 = vrot.lane.b32.xlu0 %v314, 64
    %v318 = vpop.permute.xlu0 %317
    %v320 = vmul.f32 %v314, %v318
    %322 = vrot.lane.b32.xlu0 %v320, 32
    %v323 = vpop.permute.xlu0 %322
    %v325 = vadd.f32 %v315, %v323
    %v326 = vtanh.pop %v325
    %328 = vrot.lane.b32.xlu0 %v326, 64
    %v329 = vpop.permute.xlu0 %328
    %v331 = vmul.f32 %v314, %v329
    %333 = vrot.lane.b32.xlu0 %v331, 32
    %v334 = vpop.permute.xlu0 %333
    %v335 = vsel %vm99, %v334, 0
    %337 = vmatprep.subr.mxu0 0.0
    %338 = vmatpush1.msra.mxu0 0.0
    %339 = vmatprep.subr.mxu0 0.0
    %340 = vmatpush1.msra.mxu0 0.0
    %341 = vmatprep.subr.mxu0 0.0
    %342 = vmatpush1.msra.mxu0 0.0
    %343 = vmatprep.subr.mxu0 0.0
    %344 = vmatpush1.msra.mxu0 0.0
    %345 = vmatprep.subr.mxu0 0.0
    %346 = vmatpush1.msra.mxu0 0.0
    %347 = vmatprep.subr.mxu0 0.0
    %348 = vmatpush1.msra.mxu0 0.0
    %349 = vmatprep.subr.mxu0 0.0
    %350 = vmatpush1.msra.mxu0 0.0
    %351 = vmatprep.subr.mxu0 0.0
    %352 = vmatpush1.msra.mxu0 0.0
    %353 = vmatprep.subr.mxu0 0.0
    %354 = vmatpush1.msra.mxu0 0.0
    %355 = vmatprep.subr.mxu0 0.0
    %356 = vmatpush1.msra.mxu0 0.0
    %357 = vmatprep.subr.mxu0 0.0
    %358 = vmatpush1.msra.mxu0 0.0
    %359 = vmatprep.subr.mxu0 0.0
    %360 = vmatpush1.msra.mxu0 0.0
    %361 = vmatprep.subr.mxu0 0.0
    %362 = vmatpush1.msra.mxu0 %v231
    %363 = vmatprep.subr.mxu0 0.0
    %364 = vmatpush1.msra.mxu0 %v230
    %365 = vmatprep.subr.mxu0 0.0
    %366 = vmatpush1.msra.mxu0 %v229
    %367 = vmatprep.subr.mxu0 0.0
    %368 = vmatpush1.msra.mxu0 %v228
    %369 = vmatprep.subr.mxu0 0.0
    %370 = vmatpush2.msra.mxu0 0.0
    %371 = vmatprep.subr.mxu0 0.0
    %372 = vmatpush2.msra.mxu0 0.0
    %373 = vmatprep.subr.mxu0 0.0
    %374 = vmatpush2.msra.mxu0 0.0
    %375 = vmatprep.subr.mxu0 0.0
    %376 = vmatpush2.msra.mxu0 0.0
    %377 = vmatprep.subr.mxu0 0.0
    %378 = vmatpush2.msra.mxu0 0.0
    %379 = vmatprep.subr.mxu0 0.0
    %380 = vmatpush2.msra.mxu0 0.0
    %381 = vmatprep.subr.mxu0 0.0
    %382 = vmatpush2.msra.mxu0 0.0
    %383 = vmatprep.subr.mxu0 0.0
    %384 = vmatpush2.msra.mxu0 0.0
    %385 = vmatprep.subr.mxu0 0.0
    %386 = vmatpush2.msra.mxu0 0.0
    %387 = vmatprep.subr.mxu0 0.0
    %388 = vmatpush2.msra.mxu0 0.0
    %389 = vmatprep.subr.mxu0 0.0
    %390 = vmatpush2.msra.mxu0 0.0
    %391 = vmatprep.subr.mxu0 0.0
    %392 = vmatpush2.msra.mxu0 0.0
    %393 = vmatprep.subr.mxu0 0.0
    %394 = vmatpush2.msra.mxu0 0.0
    %395 = vmatprep.subr.mxu0 0.0
    %396 = vmatpush2.msra.mxu0 0.0
    %397 = vmatprep.subr.mxu0 0.0
    %398 = vmatpush2.msra.mxu0 0.0
    %399 = vmatprep.subr.mxu0 0.0
    %400 = vmatpush2.msra.mxu0 0.0
    %401 = vmatprep.mubr.f32.mxu0 0.0
    %402 = vmatmul.mubr.f32.gmra.mxu0 %v335
    %v403 = vpop.f32.mrf.mxu0
    %v404 = vadd.f32 0.0, %v403
    %v405 = vpop.f32.mrf.mxu0
    %406 = vdwg.mxu0
    %v407 = vadd.f32 %v196, %v404
    %v408 = vmul.f32 %v235, %v407
    %v409 = vtanh.pop %v408
    %v410 = vmul.f32 %v235, %v409
    %v411 = vadd.f32 %v410, %v236
    %v412 = vmul.f32 %v411, %v325
    %414 = vrot.lane.b32.xlu0 %v411, 64
    %v415 = vpop.permute.xlu0 %414
    %v417 = vmul.f32 %v411, %v415
    %419 = vrot.lane.b32.xlu0 %v417, 32
    %v420 = vpop.permute.xlu0 %419
    %v422 = vadd.f32 %v412, %v420
    %v423 = vtanh.pop %v422
    %425 = vrot.lane.b32.xlu0 %v423, 64
    %v426 = vpop.permute.xlu0 %425
    %v428 = vmul.f32 %v411, %v426
    %430 = vrot.lane.b32.xlu0 %v428, 32
    %v431 = vpop.permute.xlu0 %430
    %v432 = vsel %vm99, %v431, 0
    %434 = vmatprep.subr.mxu0 0.0
    %435 = vmatpush1.msra.mxu0 0.0
    %436 = vmatprep.subr.mxu0 0.0
    %437 = vmatpush1.msra.mxu0 0.0
    %438 = vmatprep.subr.mxu0 0.0
    %439 = vmatpush1.msra.mxu0 0.0
    %440 = vmatprep.subr.mxu0 0.0
    %441 = vmatpush1.msra.mxu0 0.0
    %442 = vmatprep.subr.mxu0 0.0
    %443 = vmatpush1.msra.mxu0 0.0
    %444 = vmatprep.subr.mxu0 0.0
    %445 = vmatpush1.msra.mxu0 0.0
    %446 = vmatprep.subr.mxu0 0.0
    %447 = vmatpush1.msra.mxu0 0.0
    %448 = vmatprep.subr.mxu0 0.0
    %449 = vmatpush1.msra.mxu0 0.0
    %450 = vmatprep.subr.mxu0 0.0
    %451 = vmatpush1.msra.mxu0 0.0
    %452 = vmatprep.subr.mxu0 0.0
    %453 = vmatpush1.msra.mxu0 0.0
    %454 = vmatprep.subr.mxu0 0.0
    %455 = vmatpush1.msra.mxu0 0.0
    %456 = vmatprep.subr.mxu0 0.0
    %457 = vmatpush1.msra.mxu0 0.0
    %458 = vmatprep.subr.mxu0 0.0
    %459 = vmatpush1.msra.mxu0 %v231
    %460 = vmatprep.subr.mxu0 0.0
    %461 = vmatpush1.msra.mxu0 %v230
    %462 = vmatprep.subr.mxu0 0.0
    %463 = vmatpush1.msra.mxu0 %v229
    %464 = vmatprep.subr.mxu0 0.0
    %465 = vmatpush1.msra.mxu0 %v228
    %466 = vmatprep.subr.mxu0 0.0
    %467 = vmatpush2.msra.mxu0 0.0
    %468 = vmatprep.subr.mxu0 0.0
    %469 = vmatpush2.msra.mxu0 0.0
    %470 = vmatprep.subr.mxu0 0.0
    %471 = vmatpush2.msra.mxu0 0.0
    %472 = vmatprep.subr.mxu0 0.0
    %473 = vmatpush2.msra.mxu0 0.0
    %474 = vmatprep.subr.mxu0 0.0
    %475 = vmatpush2.msra.mxu0 0.0
    %476 = vmatprep.subr.mxu0 0.0
    %477 = vmatpush2.msra.mxu0 0.0
    %478 = vmatprep.subr.mxu0 0.0
    %479 = vmatpush2.msra.mxu0 0.0
    %480 = vmatprep.subr.mxu0 0.0
    %481 = vmatpush2.msra.mxu0 0.0
    %482 = vmatprep.subr.mxu0 0.0
    %483 = vmatpush2.msra.mxu0 0.0
    %484 = vmatprep.subr.mxu0 0.0
    %485 = vmatpush2.msra.mxu0 0.0
    %486 = vmatprep.subr.mxu0 0.0
    %487 = vmatpush2.msra.mxu0 0.0
    %488 = vmatprep.subr.mxu0 0.0
    %489 = vmatpush2.msra.mxu0 0.0
    %490 = vmatprep.subr.mxu0 0.0
    %491 = vmatpush2.msra.mxu0 0.0
    %492 = vmatprep.subr.mxu0 0.0
    %493 = vmatpush2.msra.mxu0 0.0
    %494 = vmatprep.subr.mxu0 0.0
    %495 = vmatpush2.msra.mxu0 0.0
    %496 = vmatprep.subr.mxu0 0.0
    %497 = vmatpush2.msra.mxu0 0.0
    %498 = vmatprep.mubr.f32.mxu0 0.0
    %499 = vmatmul.mubr.f32.gmra.mxu0 %v432
    %v500 = vpop.f32.mrf.mxu0
    %v501 = vadd.f32 0.0, %v500
    %v502 = vpop.f32.mrf.mxu0
    %503 = vdwg.mxu0
    %v504 = vadd.f32 %v201, %v501
    %v505 = vmul.f32 %v235, %v504
    %v506 = vtanh.pop %v505
    %v507 = vmul.f32 %v235, %v506
    %v508 = vadd.f32 %v507, %v236
    %v509 = vmul.f32 %v508, %v422
    %511 = vrot.lane.b32.xlu0 %v508, 64
    %v512 = vpop.permute.xlu0 %511
    %v514 = vmul.f32 %v508, %v512
    %516 = vrot.lane.b32.xlu0 %v514, 32
    %v517 = vpop.permute.xlu0 %516
    %v519 = vadd.f32 %v509, %v517
    %v520 = vtanh.pop %v519
    %522 = vrot.lane.b32.xlu0 %v520, 64
    %v523 = vpop.permute.xlu0 %522
    %v525 = vmul.f32 %v508, %v523
    %527 = vrot.lane.b32.xlu0 %v525, 32
    %v528 = vpop.permute.xlu0 %527
    %v529 = vsel %vm99, %v528, 0
    %531 = vmatprep.subr.mxu0 0.0
    %532 = vmatpush1.msra.mxu0 0.0
    %533 = vmatprep.subr.mxu0 0.0
    %534 = vmatpush1.msra.mxu0 0.0
    %535 = vmatprep.subr.mxu0 0.0
    %536 = vmatpush1.msra.mxu0 0.0
    %537 = vmatprep.subr.mxu0 0.0
    %538 = vmatpush1.msra.mxu0 0.0
    %539 = vmatprep.subr.mxu0 0.0
    %540 = vmatpush1.msra.mxu0 0.0
    %541 = vmatprep.subr.mxu0 0.0
    %542 = vmatpush1.msra.mxu0 0.0
    %543 = vmatprep.subr.mxu0 0.0
    %544 = vmatpush1.msra.mxu0 0.0
    %545 = vmatprep.subr.mxu0 0.0
    %546 = vmatpush1.msra.mxu0 0.0
    %547 = vmatprep.subr.mxu0 0.0
    %548 = vmatpush1.msra.mxu0 0.0
    %549 = vmatprep.subr.mxu0 0.0
    %550 = vmatpush1.msra.mxu0 0.0
    %551 = vmatprep.subr.mxu0 0.0
    %552 = vmatpush1.msra.mxu0 0.0
    %553 = vmatprep.subr.mxu0 0.0
    %554 = vmatpush1.msra.mxu0 0.0
    %555 = vmatprep.subr.mxu0 0.0
    %556 = vmatpush1.msra.mxu0 %v231
    %557 = vmatprep.subr.mxu0 0.0
    %558 = vmatpush1.msra.mxu0 %v230
    %559 = vmatprep.subr.mxu0 0.0
    %560 = vmatpush1.msra.mxu0 %v229
    %561 = vmatprep.subr.mxu0 0.0
    %562 = vmatpush1.msra.mxu0 %v228
    %563 = vmatprep.subr.mxu0 0.0
    %564 = vmatpush2.msra.mxu0 0.0
    %565 = vmatprep.subr.mxu0 0.0
    %566 = vmatpush2.msra.mxu0 0.0
    %567 = vmatprep.subr.mxu0 0.0
    %568 = vmatpush2.msra.mxu0 0.0
    %569 = vmatprep.subr.mxu0 0.0
    %570 = vmatpush2.msra.mxu0 0.0
    %571 = vmatprep.subr.mxu0 0.0
    %572 = vmatpush2.msra.mxu0 0.0
    %573 = vmatprep.subr.mxu0 0.0
    %574 = vmatpush2.msra.mxu0 0.0
    %575 = vmatprep.subr.mxu0 0.0
    %576 = vmatpush2.msra.mxu0 0.0
    %577 = vmatprep.subr.mxu0 0.0
    %578 = vmatpush2.msra.mxu0 0.0
    %579 = vmatprep.subr.mxu0 0.0
    %580 = vmatpush2.msra.mxu0 0.0
    %581 = vmatprep.subr.mxu0 0.0
    %582 = vmatpush2.msra.mxu0 0.0
    %583 = vmatprep.subr.mxu0 0.0
    %584 = vmatpush2.msra.mxu0 0.0
    %585 = vmatprep.subr.mxu0 0.0
    %586 = vmatpush2.msra.mxu0 0.0
    %587 = vmatprep.subr.mxu0 0.0
    %588 = vmatpush2.msra.mxu0 0.0
    %589 = vmatprep.subr.mxu0 0.0
    %590 = vmatpush2.msra.mxu0 0.0
    %591 = vmatprep.subr.mxu0 0.0
    %592 = vmatpush2.msra.mxu0 0.0
    %593 = vmatprep.subr.mxu0 0.0
    %594 = vmatpush2.msra.mxu0 0.0
    %595 = vmatprep.mubr.f32.mxu0 0.0
    %596 = vmatmul.mubr.f32.gmra.mxu0 %v529
    %v597 = vpop.f32.mrf.mxu0
    %v598 = vadd.f32 0.0, %v597
    %v599 = vpop.f32.mrf.mxu0
    %600 = vdwg.mxu0
    %v601 = vadd.f32 %v206, %v598
    %v602 = vmul.f32 %v235, %v601
    %v603 = vtanh.pop %v602
    %v604 = vmul.f32 %v235, %v603
    %v605 = vadd.f32 %v604, %v236
    %v606 = vmul.f32 %v605, %v519
    %608 = vrot.lane.b32.xlu0 %v605, 64
    %v609 = vpop.permute.xlu0 %608
    %v611 = vmul.f32 %v605, %v609
    %613 = vrot.lane.b32.xlu0 %v611, 32
    %v614 = vpop.permute.xlu0 %613
    %v616 = vadd.f32 %v606, %v614
    %v617 = vtanh.pop %v616
    %619 = vrot.lane.b32.xlu0 %v617, 64
    %v620 = vpop.permute.xlu0 %619
    %v622 = vmul.f32 %v605, %v620
    %624 = vrot.lane.b32.xlu0 %v622, 32
    %v625 = vpop.permute.xlu0 %624
    %v626 = vsel %vm99, %v625, 0
    %628 = vmatprep.subr.mxu0 0.0
    %629 = vmatpush1.msra.mxu0 0.0
    %630 = vmatprep.subr.mxu0 0.0
    %631 = vmatpush1.msra.mxu0 0.0
    %632 = vmatprep.subr.mxu0 0.0
    %633 = vmatpush1.msra.mxu0 0.0
    %634 = vmatprep.subr.mxu0 0.0
    %635 = vmatpush1.msra.mxu0 0.0
    %636 = vmatprep.subr.mxu0 0.0
    %637 = vmatpush1.msra.mxu0 0.0
    %638 = vmatprep.subr.mxu0 0.0
    %639 = vmatpush1.msra.mxu0 0.0
    %640 = vmatprep.subr.mxu0 0.0
    %641 = vmatpush1.msra.mxu0 0.0
    %642 = vmatprep.subr.mxu0 0.0
    %643 = vmatpush1.msra.mxu0 0.0
    %644 = vmatprep.subr.mxu0 0.0
    %645 = vmatpush1.msra.mxu0 0.0
    %646 = vmatprep.subr.mxu0 0.0
    %647 = vmatpush1.msra.mxu0 0.0
    %648 = vmatprep.subr.mxu0 0.0
    %649 = vmatpush1.msra.mxu0 0.0
    %650 = vmatprep.subr.mxu0 0.0
    %651 = vmatpush1.msra.mxu0 0.0
    %652 = vmatprep.subr.mxu0 0.0
    %653 = vmatpush1.msra.mxu0 %v231
    %654 = vmatprep.subr.mxu0 0.0
    %655 = vmatpush1.msra.mxu0 %v230
    %656 = vmatprep.subr.mxu0 0.0
    %657 = vmatpush1.msra.mxu0 %v229
    %658 = vmatprep.subr.mxu0 0.0
    %659 = vmatpush1.msra.mxu0 %v228
    %660 = vmatprep.subr.mxu0 0.0
    %661 = vmatpush2.msra.mxu0 0.0
    %662 = vmatprep.subr.mxu0 0.0
    %663 = vmatpush2.msra.mxu0 0.0
    %664 = vmatprep.subr.mxu0 0.0
    %665 = vmatpush2.msra.mxu0 0.0
    %666 = vmatprep.subr.mxu0 0.0
    %667 = vmatpush2.msra.mxu0 0.0
    %668 = vmatprep.subr.mxu0 0.0
    %669 = vmatpush2.msra.mxu0 0.0
    %670 = vmatprep.subr.mxu0 0.0
    %671 = vmatpush2.msra.mxu0 0.0
    %672 = vmatprep.subr.mxu0 0.0
    %673 = vmatpush2.msra.mxu0 0.0
    %674 = vmatprep.subr.mxu0 0.0
    %675 = vmatpush2.msra.mxu0 0.0
    %676 = vmatprep.subr.mxu0 0.0
    %677 = vmatpush2.msra.mxu0 0.0
    %678 = vmatprep.subr.mxu0 0.0
    %679 = vmatpush2.msra.mxu0 0.0
    %680 = vmatprep.subr.mxu0 0.0
    %681 = vmatpush2.msra.mxu0 0.0
    %682 = vmatprep.subr.mxu0 0.0
    %683 = vmatpush2.msra.mxu0 0.0
    %684 = vmatprep.subr.mxu0 0.0
    %685 = vmatpush2.msra.mxu0 0.0
    %686 = vmatprep.subr.mxu0 0.0
    %687 = vmatpush2.msra.mxu0 0.0
    %688 = vmatprep.subr.mxu0 0.0
    %689 = vmatpush2.msra.mxu0 0.0
    %690 = vmatprep.subr.mxu0 0.0
    %691 = vmatpush2.msra.mxu0 0.0
    %692 = vmatprep.mubr.f32.mxu0 0.0
    %693 = vmatmul.mubr.f32.gmra.mxu0 %v626
    %v694 = vpop.f32.mrf.mxu0
    %v695 = vadd.f32 0.0, %v694
    %v696 = vpop.f32.mrf.mxu0
    %697 = vdwg.mxu0
    %v698 = vadd.f32 %v211, %v695
    %v699 = vmul.f32 %v235, %v698
    %v700 = vtanh.pop %v699
    %v701 = vmul.f32 %v235, %v700
    %v702 = vadd.f32 %v701, %v236
    %v703 = vmul.f32 %v702, %v616
    %705 = vrot.lane.b32.xlu0 %v702, 64
    %v706 = vpop.permute.xlu0 %705
    %v708 = vmul.f32 %v702, %v706
    %710 = vrot.lane.b32.xlu0 %v708, 32
    %v711 = vpop.permute.xlu0 %710
    %v713 = vadd.f32 %v703, %v711
    %v714 = vtanh.pop %v713
    %716 = vrot.lane.b32.xlu0 %v714, 64
    %v717 = vpop.permute.xlu0 %716
    %v719 = vmul.f32 %v702, %v717
    %721 = vrot.lane.b32.xlu0 %v719, 32
    %v722 = vpop.permute.xlu0 %721
    %v723 = vsel %vm99, %v722, 0
    %725 = vmatprep.subr.mxu0 0.0
    %726 = vmatpush1.msra.mxu0 0.0
    %727 = vmatprep.subr.mxu0 0.0
    %728 = vmatpush1.msra.mxu0 0.0
    %729 = vmatprep.subr.mxu0 0.0
    %730 = vmatpush1.msra.mxu0 0.0
    %731 = vmatprep.subr.mxu0 0.0
    %732 = vmatpush1.msra.mxu0 0.0
    %733 = vmatprep.subr.mxu0 0.0
    %734 = vmatpush1.msra.mxu0 0.0
    %735 = vmatprep.subr.mxu0 0.0
    %736 = vmatpush1.msra.mxu0 0.0
    %737 = vmatprep.subr.mxu0 0.0
    %738 = vmatpush1.msra.mxu0 0.0
    %739 = vmatprep.subr.mxu0 0.0
    %740 = vmatpush1.msra.mxu0 0.0
    %741 = vmatprep.subr.mxu0 0.0
    %742 = vmatpush1.msra.mxu0 0.0
    %743 = vmatprep.subr.mxu0 0.0
    %744 = vmatpush1.msra.mxu0 0.0
    %745 = vmatprep.subr.mxu0 0.0
    %746 = vmatpush1.msra.mxu0 0.0
    %747 = vmatprep.subr.mxu0 0.0
    %748 = vmatpush1.msra.mxu0 0.0
    %749 = vmatprep.subr.mxu0 0.0
    %750 = vmatpush1.msra.mxu0 %v231
    %751 = vmatprep.subr.mxu0 0.0
    %752 = vmatpush1.msra.mxu0 %v230
    %753 = vmatprep.subr.mxu0 0.0
    %754 = vmatpush1.msra.mxu0 %v229
    %755 = vmatprep.subr.mxu0 0.0
    %756 = vmatpush1.msra.mxu0 %v228
    %757 = vmatprep.subr.mxu0 0.0
    %758 = vmatpush2.msra.mxu0 0.0
    %759 = vmatprep.subr.mxu0 0.0
    %760 = vmatpush2.msra.mxu0 0.0
    %761 = vmatprep.subr.mxu0 0.0
    %762 = vmatpush2.msra.mxu0 0.0
    %763 = vmatprep.subr.mxu0 0.0
    %764 = vmatpush2.msra.mxu0 0.0
    %765 = vmatprep.subr.mxu0 0.0
    %766 = vmatpush2.msra.mxu0 0.0
    %767 = vmatprep.subr.mxu0 0.0
    %768 = vmatpush2.msra.mxu0 0.0
    %769 = vmatprep.subr.mxu0 0.0
    %770 = vmatpush2.msra.mxu0 0.0
    %771 = vmatprep.subr.mxu0 0.0
    %772 = vmatpush2.msra.mxu0 0.0
    %773 = vmatprep.subr.mxu0 0.0
    %774 = vmatpush2.msra.mxu0 0.0
    %775 = vmatprep.subr.mxu0 0.0
    %776 = vmatpush2.msra.mxu0 0.0
    %777 = vmatprep.subr.mxu0 0.0
    %778 = vmatpush2.msra.mxu0 0.0
    %779 = vmatprep.subr.mxu0 0.0
    %780 = vmatpush2.msra.mxu0 0.0
    %781 = vmatprep.subr.mxu0 0.0
    %782 = vmatpush2.msra.mxu0 0.0
    %783 = vmatprep.subr.mxu0 0.0
    %784 = vmatpush2.msra.mxu0 0.0
    %785 = vmatprep.subr.mxu0 0.0
    %786 = vmatpush2.msra.mxu0 0.0
    %787 = vmatprep.subr.mxu0 0.0
    %788 = vmatpush2.msra.mxu0 0.0
    %789 = vmatprep.mubr.f32.mxu0 0.0
    %790 = vmatmul.mubr.f32.gmra.mxu0 %v723
    %v791 = vpop.f32.mrf.mxu0
    %v792 = vadd.f32 0.0, %v791
    %v793 = vpop.f32.mrf.mxu0
    %794 = vdwg.mxu0
    %v795 = vadd.f32 %v216, %v792
    %v796 = vmul.f32 %v235, %v795
    %v797 = vtanh.pop %v796
    %v798 = vmul.f32 %v235, %v797
    %v799 = vadd.f32 %v798, %v236
    %v800 = vmul.f32 %v799, %v713
    %802 = vrot.lane.b32.xlu0 %v799, 64
    %v803 = vpop.permute.xlu0 %802
    %v805 = vmul.f32 %v799, %v803
    %807 = vrot.lane.b32.xlu0 %v805, 32
    %v808 = vpop.permute.xlu0 %807
    %v810 = vadd.f32 %v800, %v808
    %v811 = vtanh.pop %v810
    %813 = vrot.lane.b32.xlu0 %v811, 64
    %v814 = vpop.permute.xlu0 %813
    %v816 = vmul.f32 %v799, %v814
    %818 = vrot.lane.b32.xlu0 %v816, 32
    %v819 = vpop.permute.xlu0 %818
    %v820 = vsel %vm99, %v819, 0
    %822 = vmatprep.subr.mxu0 0.0
    %823 = vmatpush1.msra.mxu0 0.0
    %824 = vmatprep.subr.mxu0 0.0
    %825 = vmatpush1.msra.mxu0 0.0
    %826 = vmatprep.subr.mxu0 0.0
    %827 = vmatpush1.msra.mxu0 0.0
    %828 = vmatprep.subr.mxu0 0.0
    %829 = vmatpush1.msra.mxu0 0.0
    %830 = vmatprep.subr.mxu0 0.0
    %831 = vmatpush1.msra.mxu0 0.0
    %832 = vmatprep.subr.mxu0 0.0
    %833 = vmatpush1.msra.mxu0 0.0
    %834 = vmatprep.subr.mxu0 0.0
    %835 = vmatpush1.msra.mxu0 0.0
    %836 = vmatprep.subr.mxu0 0.0
    %837 = vmatpush1.msra.mxu0 0.0
    %838 = vmatprep.subr.mxu0 0.0
    %839 = vmatpush1.msra.mxu0 0.0
    %840 = vmatprep.subr.mxu0 0.0
    %841 = vmatpush1.msra.mxu0 0.0
    %842 = vmatprep.subr.mxu0 0.0
    %843 = vmatpush1.msra.mxu0 0.0
    %844 = vmatprep.subr.mxu0 0.0
    %845 = vmatpush1.msra.mxu0 0.0
    %846 = vmatprep.subr.mxu0 0.0
    %847 = vmatpush1.msra.mxu0 %v231
    %848 = vmatprep.subr.mxu0 0.0
    %849 = vmatpush1.msra.mxu0 %v230
    %850 = vmatprep.subr.mxu0 0.0
    %851 = vmatpush1.msra.mxu0 %v229
    %852 = vmatprep.subr.mxu0 0.0
    %853 = vmatpush1.msra.mxu0 %v228
    %854 = vmatprep.subr.mxu0 0.0
    %855 = vmatpush2.msra.mxu0 0.0
    %856 = vmatprep.subr.mxu0 0.0
    %857 = vmatpush2.msra.mxu0 0.0
    %858 = vmatprep.subr.mxu0 0.0
    %859 = vmatpush2.msra.mxu0 0.0
    %860 = vmatprep.subr.mxu0 0.0
    %861 = vmatpush2.msra.mxu0 0.0
    %862 = vmatprep.subr.mxu0 0.0
    %863 = vmatpush2.msra.mxu0 0.0
    %864 = vmatprep.subr.mxu0 0.0
    %865 = vmatpush2.msra.mxu0 0.0
    %866 = vmatprep.subr.mxu0 0.0
    %867 = vmatpush2.msra.mxu0 0.0
    %868 = vmatprep.subr.mxu0 0.0
    %869 = vmatpush2.msra.mxu0 0.0
    %870 = vmatprep.subr.mxu0 0.0
    %871 = vmatpush2.msra.mxu0 0.0
    %872 = vmatprep.subr.mxu0 0.0
    %873 = vmatpush2.msra.mxu0 0.0
    %874 = vmatprep.subr.mxu0 0.0
    %875 = vmatpush2.msra.mxu0 0.0
    %876 = vmatprep.subr.mxu0 0.0
    %877 = vmatpush2.msra.mxu0 0.0
    %878 = vmatprep.subr.mxu0 0.0
    %879 = vmatpush2.msra.mxu0 0.0
    %880 = vmatprep.subr.mxu0 0.0
    %881 = vmatpush2.msra.mxu0 0.0
    %882 = vmatprep.subr.mxu0 0.0
    %883 = vmatpush2.msra.mxu0 0.0
    %884 = vmatprep.subr.mxu0 0.0
    %885 = vmatpush2.msra.mxu0 0.0
    %886 = vmatprep.mubr.f32.mxu0 0.0
    %887 = vmatmul.mubr.f32.gmra.mxu0 %v820
    %v888 = vpop.f32.mrf.mxu0
    %v889 = vadd.f32 0.0, %v888
    %v890 = vpop.f32.mrf.mxu0
    %891 = vdwg.mxu0
    %v892 = vadd.f32 %v221, %v889
    %v893 = vmul.f32 %v235, %v892
    %v894 = vtanh.pop %v893
    %v895 = vmul.f32 %v235, %v894
    %v896 = vadd.f32 %v895, %v236
    %v897 = vmul.f32 %v896, %v810
    %899 = vrot.lane.b32.xlu0 %v896, 64
    %v900 = vpop.permute.xlu0 %899
    %v902 = vmul.f32 %v896, %v900
    %904 = vrot.lane.b32.xlu0 %v902, 32
    %v905 = vpop.permute.xlu0 %904
    %v907 = vadd.f32 %v897, %v905
    %v908 = vtanh.pop %v907
    %910 = vrot.lane.b32.xlu0 %v908, 64
    %v911 = vpop.permute.xlu0 %910
    %v913 = vmul.f32 %v896, %v911
    %v914 = vld [vmem:[#allocation2] sm:$0xff]
    %v915 = vld [vmem:[#allocation2 + $0x8] sm:$0xff]
    %v916 = vld [vmem:[#allocation2 + $0x10] sm:$0xff]
    %v917 = vld [vmem:[#allocation2 + $0x18] sm:$0xff]
    %v918 = vld [vmem:[%s5] sm:$0x1]
    %v920 = vlaneseq
    %v921 = vshrl.u32 %v920, 7
    %v922 = vsub.s32 0, %v921
    %v923 = vrot.slane %v918, %v922
    %925 = vmatprep.subr.mxu0 0.0
    %926 = vmatpush1.msra.mxu0 0.0
    %927 = vmatprep.subr.mxu0 0.0
    %928 = vmatpush1.msra.mxu0 0.0
    %929 = vmatprep.subr.mxu0 0.0
    %930 = vmatpush1.msra.mxu0 0.0
    %931 = vmatprep.subr.mxu0 0.0
    %932 = vmatpush1.msra.mxu0 0.0
    %933 = vmatprep.subr.mxu0 0.0
    %934 = vmatpush1.msra.mxu0 0.0
    %935 = vmatprep.subr.mxu0 0.0
    %936 = vmatpush1.msra.mxu0 0.0
    %937 = vmatprep.subr.mxu0 0.0
    %938 = vmatpush1.msra.mxu0 0.0
    %939 = vmatprep.subr.mxu0 0.0
    %940 = vmatpush1.msra.mxu0 0.0
    %941 = vmatprep.subr.mxu0 0.0
    %942 = vmatpush1.msra.mxu0 0.0
    %943 = vmatprep.subr.mxu0 0.0
    %944 = vmatpush1.msra.mxu0 0.0
    %945 = vmatprep.subr.mxu0 0.0
    %946 = vmatpush1.msra.mxu0 0.0
    %947 = vmatprep.subr.mxu0 0.0
    %948 = vmatpush1.msra.mxu0 0.0
    %949 = vmatprep.subr.mxu0 0.0
    %950 = vmatpush1.msra.mxu0 %v917
    %951 = vmatprep.subr.mxu0 0.0
    %952 = vmatpush1.msra.mxu0 %v916
    %953 = vmatprep.subr.mxu0 0.0
    %954 = vmatpush1.msra.mxu0 %v915
    %955 = vmatprep.subr.mxu0 0.0
    %956 = vmatpush1.msra.mxu0 %v914
    %957 = vmatprep.subr.mxu0 0.0
    %958 = vmatpush2.msra.mxu0 0.0
    %959 = vmatprep.subr.mxu0 0.0
    %960 = vmatpush2.msra.mxu0 0.0
    %961 = vmatprep.subr.mxu0 0.0
    %962 = vmatpush2.msra.mxu0 0.0
    %963 = vmatprep.subr.mxu0 0.0
    %964 = vmatpush2.msra.mxu0 0.0
    %965 = vmatprep.subr.mxu0 0.0
    %966 = vmatpush2.msra.mxu0 0.0
    %967 = vmatprep.subr.mxu0 0.0
    %968 = vmatpush2.msra.mxu0 0.0
    %969 = vmatprep.subr.mxu0 0.0
    %970 = vmatpush2.msra.mxu0 0.0
    %971 = vmatprep.subr.mxu0 0.0
    %972 = vmatpush2.msra.mxu0 0.0
    %973 = vmatprep.subr.mxu0 0.0
    %974 = vmatpush2.msra.mxu0 0.0
    %975 = vmatprep.subr.mxu0 0.0
    %976 = vmatpush2.msra.mxu0 0.0
    %977 = vmatprep.subr.mxu0 0.0
    %978 = vmatpush2.msra.mxu0 0.0
    %979 = vmatprep.subr.mxu0 0.0
    %980 = vmatpush2.msra.mxu0 0.0
    %981 = vmatprep.subr.mxu0 0.0
    %982 = vmatpush2.msra.mxu0 0.0
    %983 = vmatprep.subr.mxu0 0.0
    %984 = vmatpush2.msra.mxu0 0.0
    %985 = vmatprep.subr.mxu0 0.0
    %986 = vmatpush2.msra.mxu0 0.0
    %987 = vmatprep.subr.mxu0 0.0
    %988 = vmatpush2.msra.mxu0 0.0
    %989 = vmatprep.mubr.f32.mxu0 0.0
    %990 = vmatmul.mubr.f32.gmra.mxu0 %v335
    %v991 = vpop.f32.mrf.mxu0
    %v992 = vadd.f32 %v923, %v991
    %v993 = vpop.f32.mrf.mxu0
    %994 = vdwg.mxu0
    %v995 = vmul.f32 %v992, 0.5
    %v996 = vtanh.pop %v995
    %v997 = vmul.f32 %v996, 0.5
    %v998 = vadd.f32 %v997, 0.5
    %999 = vst [vmem:[#allocation5] sm:$0xff] %v998
    %1000 = vmatprep.subr.mxu0 0.0
    %1001 = vmatpush1.msra.mxu0 0.0
    %1002 = vmatprep.subr.mxu0 0.0
    %1003 = vmatpush1.msra.mxu0 0.0
    %1004 = vmatprep.subr.mxu0 0.0
    %1005 = vmatpush1.msra.mxu0 0.0
    %1006 = vmatprep.subr.mxu0 0.0
    %1007 = vmatpush1.msra.mxu0 0.0
    %1008 = vmatprep.subr.mxu0 0.0
    %1009 = vmatpush1.msra.mxu0 0.0
    %1010 = vmatprep.subr.mxu0 0.0
    %1011 = vmatpush1.msra.mxu0 0.0
    %1012 = vmatprep.subr.mxu0 0.0
    %1013 = vmatpush1.msra.mxu0 0.0
    %1014 = vmatprep.subr.mxu0 0.0
    %1015 = vmatpush1.msra.mxu0 0.0
    %1016 = vmatprep.subr.mxu0 0.0
    %1017 = vmatpush1.msra.mxu0 0.0
    %1018 = vmatprep.subr.mxu0 0.0
    %1019 = vmatpush1.msra.mxu0 0.0
    %1020 = vmatprep.subr.mxu0 0.0
    %1021 = vmatpush1.msra.mxu0 0.0
    %1022 = vmatprep.subr.mxu0 0.0
    %1023 = vmatpush1.msra.mxu0 0.0
    %1024 = vmatprep.subr.mxu0 0.0
    %1025 = vmatpush1.msra.mxu0 %v917
    %1026 = vmatprep.subr.mxu0 0.0
    %1027 = vmatpush1.msra.mxu0 %v916
    %1028 = vmatprep.subr.mxu0 0.0
    %1029 = vmatpush1.msra.mxu0 %v915
    %1030 = vmatprep.subr.mxu0 0.0
    %1031 = vmatpush1.msra.mxu0 %v914
    %1032 = vmatprep.subr.mxu0 0.0
    %1033 = vmatpush2.msra.mxu0 0.0
    %1034 = vmatprep.subr.mxu0 0.0
    %1035 = vmatpush2.msra.mxu0 0.0
    %1036 = vmatprep.subr.mxu0 0.0
    %1037 = vmatpush2.msra.mxu0 0.0
    %1038 = vmatprep.subr.mxu0 0.0
    %1039 = vmatpush2.msra.mxu0 0.0
    %1040 = vmatprep.subr.mxu0 0.0
    %1041 = vmatpush2.msra.mxu0 0.0
    %1042 = vmatprep.subr.mxu0 0.0
    %1043 = vmatpush2.msra.mxu0 0.0
    %1044 = vmatprep.subr.mxu0 0.0
    %1045 = vmatpush2.msra.mxu0 0.0
    %1046 = vmatprep.subr.mxu0 0.0
    %1047 = vmatpush2.msra.mxu0 0.0
    %1048 = vmatprep.subr.mxu0 0.0
    %1049 = vmatpush2.msra.mxu0 0.0
    %1050 = vmatprep.subr.mxu0 0.0
    %1051 = vmatpush2.msra.mxu0 0.0
    %1052 = vmatprep.subr.mxu0 0.0
    %1053 = vmatpush2.msra.mxu0 0.0
    %1054 = vmatprep.subr.mxu0 0.0
    %1055 = vmatpush2.msra.mxu0 0.0
    %1056 = vmatprep.subr.mxu0 0.0
    %1057 = vmatpush2.msra.mxu0 0.0
    %1058 = vmatprep.subr.mxu0 0.0
    %1059 = vmatpush2.msra.mxu0 0.0
    %1060 = vmatprep.subr.mxu0 0.0
    %1061 = vmatpush2.msra.mxu0 0.0
    %1062 = vmatprep.subr.mxu0 0.0
    %1063 = vmatpush2.msra.mxu0 0.0
    %1064 = vmatprep.mubr.f32.mxu0 0.0
    %1065 = vmatmul.mubr.f32.gmra.mxu0 %v432
    %v1066 = vpop.f32.mrf.mxu0
    %v1067 = vadd.f32 %v923, %v1066
    %v1068 = vpop.f32.mrf.mxu0
    %1069 = vdwg.mxu0
    %v1070 = vmul.f32 %v1067, 0.5
    %v1071 = vtanh.pop %v1070
    %v1072 = vmul.f32 %v1071, 0.5
    %v1073 = vadd.f32 %v1072, 0.5
    %1074 = vst [vmem:[#allocation5 + $0x8] sm:$0xff] %v1073
    %1075 = vmatprep.subr.mxu0 0.0
    %1076 = vmatpush1.msra.mxu0 0.0
    %1077 = vmatprep.subr.mxu0 0.0
    %1078 = vmatpush1.msra.mxu0 0.0
    %1079 = vmatprep.subr.mxu0 0.0
    %1080 = vmatpush1.msra.mxu0 0.0
    %1081 = vmatprep.subr.mxu0 0.0
    %1082 = vmatpush1.msra.mxu0 0.0
    %1083 = vmatprep.subr.mxu0 0.0
    %1084 = vmatpush1.msra.mxu0 0.0
    %1085 = vmatprep.subr.mxu0 0.0
    %1086 = vmatpush1.msra.mxu0 0.0
    %1087 = vmatprep.subr.mxu0 0.0
    %1088 = vmatpush1.msra.mxu0 0.0
    %1089 = vmatprep.subr.mxu0 0.0
    %1090 = vmatpush1.msra.mxu0 0.0
    %1091 = vmatprep.subr.mxu0 0.0
    %1092 = vmatpush1.msra.mxu0 0.0
    %1093 = vmatprep.subr.mxu0 0.0
    %1094 = vmatpush1.msra.mxu0 0.0
    %1095 = vmatprep.subr.mxu0 0.0
    %1096 = vmatpush1.msra.mxu0 0.0
    %1097 = vmatprep.subr.mxu0 0.0
    %1098 = vmatpush1.msra.mxu0 0.0
    %1099 = vmatprep.subr.mxu0 0.0
    %1100 = vmatpush1.msra.mxu0 %v917
    %1101 = vmatprep.subr.mxu0 0.0
    %1102 = vmatpush1.msra.mxu0 %v916
    %1103 = vmatprep.subr.mxu0 0.0
    %1104 = vmatpush1.msra.mxu0 %v915
    %1105 = vmatprep.subr.mxu0 0.0
    %1106 = vmatpush1.msra.mxu0 %v914
    %1107 = vmatprep.subr.mxu0 0.0
    %1108 = vmatpush2.msra.mxu0 0.0
    %1109 = vmatprep.subr.mxu0 0.0
    %1110 = vmatpush2.msra.mxu0 0.0
    %1111 = vmatprep.subr.mxu0 0.0
    %1112 = vmatpush2.msra.mxu0 0.0
    %1113 = vmatprep.subr.mxu0 0.0
    %1114 = vmatpush2.msra.mxu0 0.0
    %1115 = vmatprep.subr.mxu0 0.0
    %1116 = vmatpush2.msra.mxu0 0.0
    %1117 = vmatprep.subr.mxu0 0.0
    %1118 = vmatpush2.msra.mxu0 0.0
    %1119 = vmatprep.subr.mxu0 0.0
    %1120 = vmatpush2.msra.mxu0 0.0
    %1121 = vmatprep.subr.mxu0 0.0
    %1122 = vmatpush2.msra.mxu0 0.0
    %1123 = vmatprep.subr.mxu0 0.0
    %1124 = vmatpush2.msra.mxu0 0.0
    %1125 = vmatprep.subr.mxu0 0.0
    %1126 = vmatpush2.msra.mxu0 0.0
    %1127 = vmatprep.subr.mxu0 0.0
    %1128 = vmatpush2.msra.mxu0 0.0
    %1129 = vmatprep.subr.mxu0 0.0
    %1130 = vmatpush2.msra.mxu0 0.0
    %1131 = vmatprep.subr.mxu0 0.0
    %1132 = vmatpush2.msra.mxu0 0.0
    %1133 = vmatprep.subr.mxu0 0.0
    %1134 = vmatpush2.msra.mxu0 0.0
    %1135 = vmatprep.subr.mxu0 0.0
    %1136 = vmatpush2.msra.mxu0 0.0
    %1137 = vmatprep.subr.mxu0 0.0
    %1138 = vmatpush2.msra.mxu0 0.0
    %1139 = vmatprep.mubr.f32.mxu0 0.0
    %1140 = vmatmul.mubr.f32.gmra.mxu0 %v529
    %v1141 = vpop.f32.mrf.mxu0
    %v1142 = vadd.f32 %v923, %v1141
    %v1143 = vpop.f32.mrf.mxu0
    %1144 = vdwg.mxu0
    %v1145 = vmul.f32 %v1142, 0.5
    %v1146 = vtanh.pop %v1145
    %v1147 = vmul.f32 %v1146, 0.5
    %v1148 = vadd.f32 %v1147, 0.5
    %1149 = vst [vmem:[#allocation5 + $0x10] sm:$0xff] %v1148
    %1150 = vmatprep.subr.mxu0 0.0
    %1151 = vmatpush1.msra.mxu0 0.0
    %1152 = vmatprep.subr.mxu0 0.0
    %1153 = vmatpush1.msra.mxu0 0.0
    %1154 = vmatprep.subr.mxu0 0.0
    %1155 = vmatpush1.msra.mxu0 0.0
    %1156 = vmatprep.subr.mxu0 0.0
    %1157 = vmatpush1.msra.mxu0 0.0
    %1158 = vmatprep.subr.mxu0 0.0
    %1159 = vmatpush1.msra.mxu0 0.0
    %1160 = vmatprep.subr.mxu0 0.0
    %1161 = vmatpush1.msra.mxu0 0.0
    %1162 = vmatprep.subr.mxu0 0.0
    %1163 = vmatpush1.msra.mxu0 0.0
    %1164 = vmatprep.subr.mxu0 0.0
    %1165 = vmatpush1.msra.mxu0 0.0
    %1166 = vmatprep.subr.mxu0 0.0
    %1167 = vmatpush1.msra.mxu0 0.0
    %1168 = vmatprep.subr.mxu0 0.0
    %1169 = vmatpush1.msra.mxu0 0.0
    %1170 = vmatprep.subr.mxu0 0.0
    %1171 = vmatpush1.msra.mxu0 0.0
    %1172 = vmatprep.subr.mxu0 0.0
    %1173 = vmatpush1.msra.mxu0 0.0
    %1174 = vmatprep.subr.mxu0 0.0
    %1175 = vmatpush1.msra.mxu0 %v917
    %1176 = vmatprep.subr.mxu0 0.0
    %1177 = vmatpush1.msra.mxu0 %v916
    %1178 = vmatprep.subr.mxu0 0.0
    %1179 = vmatpush1.msra.mxu0 %v915
    %1180 = vmatprep.subr.mxu0 0.0
    %1181 = vmatpush1.msra.mxu0 %v914
    %1182 = vmatprep.subr.mxu0 0.0
    %1183 = vmatpush2.msra.mxu0 0.0
    %1184 = vmatprep.subr.mxu0 0.0
    %1185 = vmatpush2.msra.mxu0 0.0
    %1186 = vmatprep.subr.mxu0 0.0
    %1187 = vmatpush2.msra.mxu0 0.0
    %1188 = vmatprep.subr.mxu0 0.0
    %1189 = vmatpush2.msra.mxu0 0.0
    %1190 = vmatprep.subr.mxu0 0.0
    %1191 = vmatpush2.msra.mxu0 0.0
    %1192 = vmatprep.subr.mxu0 0.0
    %1193 = vmatpush2.msra.mxu0 0.0
    %1194 = vmatprep.subr.mxu0 0.0
    %1195 = vmatpush2.msra.mxu0 0.0
    %1196 = vmatprep.subr.mxu0 0.0
    %1197 = vmatpush2.msra.mxu0 0.0
    %1198 = vmatprep.subr.mxu0 0.0
    %1199 = vmatpush2.msra.mxu0 0.0
    %1200 = vmatprep.subr.mxu0 0.0
    %1201 = vmatpush2.msra.mxu0 0.0
    %1202 = vmatprep.subr.mxu0 0.0
    %1203 = vmatpush2.msra.mxu0 0.0
    %1204 = vmatprep.subr.mxu0 0.0
    %1205 = vmatpush2.msra.mxu0 0.0
    %1206 = vmatprep.subr.mxu0 0.0
    %1207 = vmatpush2.msra.mxu0 0.0
    %1208 = vmatprep.subr.mxu0 0.0
    %1209 = vmatpush2.msra.mxu0 0.0
    %1210 = vmatprep.subr.mxu0 0.0
    %1211 = vmatpush2.msra.mxu0 0.0
    %1212 = vmatprep.subr.mxu0 0.0
    %1213 = vmatpush2.msra.mxu0 0.0
    %1214 = vmatprep.mubr.f32.mxu0 0.0
    %1215 = vmatmul.mubr.f32.gmra.mxu0 %v626
    %v1216 = vpop.f32.mrf.mxu0
    %v1217 = vadd.f32 %v923, %v1216
    %v1218 = vpop.f32.mrf.mxu0
    %1219 = vdwg.mxu0
    %v1220 = vmul.f32 %v1217, 0.5
    %v1221 = vtanh.pop %v1220
    %v1222 = vmul.f32 %v1221, 0.5
    %v1223 = vadd.f32 %v1222, 0.5
    %1224 = vst [vmem:[#allocation5 + $0x18] sm:$0xff] %v1223
    %1225 = vmatprep.subr.mxu0 0.0
    %1226 = vmatpush1.msra.mxu0 0.0
    %1227 = vmatprep.subr.mxu0 0.0
    %1228 = vmatpush1.msra.mxu0 0.0
    %1229 = vmatprep.subr.mxu0 0.0
    %1230 = vmatpush1.msra.mxu0 0.0
    %1231 = vmatprep.subr.mxu0 0.0
    %1232 = vmatpush1.msra.mxu0 0.0
    %1233 = vmatprep.subr.mxu0 0.0
    %1234 = vmatpush1.msra.mxu0 0.0
    %1235 = vmatprep.subr.mxu0 0.0
    %1236 = vmatpush1.msra.mxu0 0.0
    %1237 = vmatprep.subr.mxu0 0.0
    %1238 = vmatpush1.msra.mxu0 0.0
    %1239 = vmatprep.subr.mxu0 0.0
    %1240 = vmatpush1.msra.mxu0 0.0
    %1241 = vmatprep.subr.mxu0 0.0
    %1242 = vmatpush1.msra.mxu0 0.0
    %1243 = vmatprep.subr.mxu0 0.0
    %1244 = vmatpush1.msra.mxu0 0.0
    %1245 = vmatprep.subr.mxu0 0.0
    %1246 = vmatpush1.msra.mxu0 0.0
    %1247 = vmatprep.subr.mxu0 0.0
    %1248 = vmatpush1.msra.mxu0 0.0
    %1249 = vmatprep.subr.mxu0 0.0
    %1250 = vmatpush1.msra.mxu0 %v917
    %1251 = vmatprep.subr.mxu0 0.0
    %1252 = vmatpush1.msra.mxu0 %v916
    %1253 = vmatprep.subr.mxu0 0.0
    %1254 = vmatpush1.msra.mxu0 %v915
    %1255 = vmatprep.subr.mxu0 0.0
    %1256 = vmatpush1.msra.mxu0 %v914
    %1257 = vmatprep.subr.mxu0 0.0
    %1258 = vmatpush2.msra.mxu0 0.0
    %1259 = vmatprep.subr.mxu0 0.0
    %1260 = vmatpush2.msra.mxu0 0.0
    %1261 = vmatprep.subr.mxu0 0.0
    %1262 = vmatpush2.msra.mxu0 0.0
    %1263 = vmatprep.subr.mxu0 0.0
    %1264 = vmatpush2.msra.mxu0 0.0
    %1265 = vmatprep.subr.mxu0 0.0
    %1266 = vmatpush2.msra.mxu0 0.0
    %1267 = vmatprep.subr.mxu0 0.0
    %1268 = vmatpush2.msra.mxu0 0.0
    %1269 = vmatprep.subr.mxu0 0.0
    %1270 = vmatpush2.msra.mxu0 0.0
    %1271 = vmatprep.subr.mxu0 0.0
    %1272 = vmatpush2.msra.mxu0 0.0
    %1273 = vmatprep.subr.mxu0 0.0
    %1274 = vmatpush2.msra.mxu0 0.0
    %1275 = vmatprep.subr.mxu0 0.0
    %1276 = vmatpush2.msra.mxu0 0.0
    %1277 = vmatprep.subr.mxu0 0.0
    %1278 = vmatpush2.msra.mxu0 0.0
    %1279 = vmatprep.subr.mxu0 0.0
    %1280 = vmatpush2.msra.mxu0 0.0
    %1281 = vmatprep.subr.mxu0 0.0
    %1282 = vmatpush2.msra.mxu0 0.0
    %1283 = vmatprep.subr.mxu0 0.0
    %1284 = vmatpush2.msra.mxu0 0.0
    %1285 = vmatprep.subr.mxu0 0.0
    %1286 = vmatpush2.msra.mxu0 0.0
    %1287 = vmatprep.subr.mxu0 0.0
    %1288 = vmatpush2.msra.mxu0 0.0
    %1289 = vmatprep.mubr.f32.mxu0 0.0
    %1290 = vmatmul.mubr.f32.gmra.mxu0 %v723
    %v1291 = vpop.f32.mrf.mxu0
    %v1292 = vadd.f32 %v923, %v1291
    %v1293 = vpop.f32.mrf.mxu0
    %1294 = vdwg.mxu0
    %v1295 = vmul.f32 %v1292, 0.5
    %v1296 = vtanh.pop %v1295
    %v1297 = vmul.f32 %v1296, 0.5
    %v1298 = vadd.f32 %v1297, 0.5
    %1299 = vst [vmem:[#allocation5 + $0x20] sm:$0xff] %v1298
    %1300 = vmatprep.subr.mxu0 0.0
    %1301 = vmatpush1.msra.mxu0 0.0
    %1302 = vmatprep.subr.mxu0 0.0
    %1303 = vmatpush1.msra.mxu0 0.0
    %1304 = vmatprep.subr.mxu0 0.0
    %1305 = vmatpush1.msra.mxu0 0.0
    %1306 = vmatprep.subr.mxu0 0.0
    %1307 = vmatpush1.msra.mxu0 0.0
    %1308 = vmatprep.subr.mxu0 0.0
    %1309 = vmatpush1.msra.mxu0 0.0
    %1310 = vmatprep.subr.mxu0 0.0
    %1311 = vmatpush1.msra.mxu0 0.0
    %1312 = vmatprep.subr.mxu0 0.0
    %1313 = vmatpush1.msra.mxu0 0.0
    %1314 = vmatprep.subr.mxu0 0.0
    %1315 = vmatpush1.msra.mxu0 0.0
    %1316 = vmatprep.subr.mxu0 0.0
    %1317 = vmatpush1.msra.mxu0 0.0
    %1318 = vmatprep.subr.mxu0 0.0
    %1319 = vmatpush1.msra.mxu0 0.0
    %1320 = vmatprep.subr.mxu0 0.0
    %1321 = vmatpush1.msra.mxu0 0.0
    %1322 = vmatprep.subr.mxu0 0.0
    %1323 = vmatpush1.msra.mxu0 0.0
    %1324 = vmatprep.subr.mxu0 0.0
    %1325 = vmatpush1.msra.mxu0 %v917
    %1326 = vmatprep.subr.mxu0 0.0
    %1327 = vmatpush1.msra.mxu0 %v916
    %1328 = vmatprep.subr.mxu0 0.0
    %1329 = vmatpush1.msra.mxu0 %v915
    %1330 = vmatprep.subr.mxu0 0.0
    %1331 = vmatpush1.msra.mxu0 %v914
    %1332 = vmatprep.subr.mxu0 0.0
    %1333 = vmatpush2.msra.mxu0 0.0
    %1334 = vmatprep.subr.mxu0 0.0
    %1335 = vmatpush2.msra.mxu0 0.0
    %1336 = vmatprep.subr.mxu0 0.0
    %1337 = vmatpush2.msra.mxu0 0.0
    %1338 = vmatprep.subr.mxu0 0.0
    %1339 = vmatpush2.msra.mxu0 0.0
    %1340 = vmatprep.subr.mxu0 0.0
    %1341 = vmatpush2.msra.mxu0 0.0
    %1342 = vmatprep.subr.mxu0 0.0
    %1343 = vmatpush2.msra.mxu0 0.0
    %1344 = vmatprep.subr.mxu0 0.0
    %1345 = vmatpush2.msra.mxu0 0.0
    %1346 = vmatprep.subr.mxu0 0.0
    %1347 = vmatpush2.msra.mxu0 0.0
    %1348 = vmatprep.subr.mxu0 0.0
    %1349 = vmatpush2.msra.mxu0 0.0
    %1350 = vmatprep.subr.mxu0 0.0
    %1351 = vmatpush2.msra.mxu0 0.0
    %1352 = vmatprep.subr.mxu0 0.0
    %1353 = vmatpush2.msra.mxu0 0.0
    %1354 = vmatprep.subr.mxu0 0.0
    %1355 = vmatpush2.msra.mxu0 0.0
    %1356 = vmatprep.subr.mxu0 0.0
    %1357 = vmatpush2.msra.mxu0 0.0
    %1358 = vmatprep.subr.mxu0 0.0
    %1359 = vmatpush2.msra.mxu0 0.0
    %1360 = vmatprep.subr.mxu0 0.0
    %1361 = vmatpush2.msra.mxu0 0.0
    %1362 = vmatprep.subr.mxu0 0.0
    %1363 = vmatpush2.msra.mxu0 0.0
    %1364 = vmatprep.mubr.f32.mxu0 0.0
    %1365 = vmatmul.mubr.f32.gmra.mxu0 %v820
    %v1366 = vpop.f32.mrf.mxu0
    %v1367 = vadd.f32 %v923, %v1366
    %v1368 = vpop.f32.mrf.mxu0
    %1369 = vdwg.mxu0
    %v1370 = vmul.f32 %v1367, 0.5
    %v1371 = vtanh.pop %v1370
    %v1372 = vmul.f32 %v1371, 0.5
    %v1373 = vadd.f32 %v1372, 0.5
    %1374 = vst [vmem:[#allocation5 + $0x28] sm:$0xff] %v1373
    %1376 = vrot.lane.b32.xlu0 %v913, 32
    %v1377 = vpop.permute.xlu0 %1376
    %v1378 = vsel %vm99, %v1377, 0
    %1380 = vmatprep.subr.mxu0 0.0
    %1381 = vmatpush1.msra.mxu0 0.0
    %1382 = vmatprep.subr.mxu0 0.0
    %1383 = vmatpush1.msra.mxu0 0.0
    %1384 = vmatprep.subr.mxu0 0.0
    %1385 = vmatpush1.msra.mxu0 0.0
    %1386 = vmatprep.subr.mxu0 0.0
    %1387 = vmatpush1.msra.mxu0 0.0
    %1388 = vmatprep.subr.mxu0 0.0
    %1389 = vmatpush1.msra.mxu0 0.0
    %1390 = vmatprep.subr.mxu0 0.0
    %1391 = vmatpush1.msra.mxu0 0.0
    %1392 = vmatprep.subr.mxu0 0.0
    %1393 = vmatpush1.msra.mxu0 0.0
    %1394 = vmatprep.subr.mxu0 0.0
    %1395 = vmatpush1.msra.mxu0 0.0
    %1396 = vmatprep.subr.mxu0 0.0
    %1397 = vmatpush1.msra.mxu0 0.0
    %1398 = vmatprep.subr.mxu0 0.0
    %1399 = vmatpush1.msra.mxu0 0.0
    %1400 = vmatprep.subr.mxu0 0.0
    %1401 = vmatpush1.msra.mxu0 0.0
    %1402 = vmatprep.subr.mxu0 0.0
    %1403 = vmatpush1.msra.mxu0 0.0
    %1404 = vmatprep.subr.mxu0 0.0
    %1405 = vmatpush1.msra.mxu0 %v917
    %1406 = vmatprep.subr.mxu0 0.0
    %1407 = vmatpush1.msra.mxu0 %v916
    %1408 = vmatprep.subr.mxu0 0.0
    %1409 = vmatpush1.msra.mxu0 %v915
    %1410 = vmatprep.subr.mxu0 0.0
    %1411 = vmatpush1.msra.mxu0 %v914
    %1412 = vmatprep.subr.mxu0 0.0
    %1413 = vmatpush2.msra.mxu0 0.0
    %1414 = vmatprep.subr.mxu0 0.0
    %1415 = vmatpush2.msra.mxu0 0.0
    %1416 = vmatprep.subr.mxu0 0.0
    %1417 = vmatpush2.msra.mxu0 0.0
    %1418 = vmatprep.subr.mxu0 0.0
    %1419 = vmatpush2.msra.mxu0 0.0
    %1420 = vmatprep.subr.mxu0 0.0
    %1421 = vmatpush2.msra.mxu0 0.0
    %1422 = vmatprep.subr.mxu0 0.0
    %1423 = vmatpush2.msra.mxu0 0.0
    %1424 = vmatprep.subr.mxu0 0.0
    %1425 = vmatpush2.msra.mxu0 0.0
    %1426 = vmatprep.subr.mxu0 0.0
    %1427 = vmatpush2.msra.mxu0 0.0
    %1428 = vmatprep.subr.mxu0 0.0
    %1429 = vmatpush2.msra.mxu0 0.0
    %1430 = vmatprep.subr.mxu0 0.0
    %1431 = vmatpush2.msra.mxu0 0.0
    %1432 = vmatprep.subr.mxu0 0.0
    %1433 = vmatpush2.msra.mxu0 0.0
    %1434 = vmatprep.subr.mxu0 0.0
    %1435 = vmatpush2.msra.mxu0 0.0
    %1436 = vmatprep.subr.mxu0 0.0
    %1437 = vmatpush2.msra.mxu0 0.0
    %1438 = vmatprep.subr.mxu0 0.0
    %1439 = vmatpush2.msra.mxu0 0.0
    %1440 = vmatprep.subr.mxu0 0.0
    %1441 = vmatpush2.msra.mxu0 0.0
    %1442 = vmatprep.subr.mxu0 0.0
    %1443 = vmatpush2.msra.mxu0 0.0
    %1444 = vmatprep.mubr.f32.mxu0 0.0
    %1445 = vmatmul.mubr.f32.gmra.mxu0 %v1378
    %v1446 = vpop.f32.mrf.mxu0
    %v1447 = vadd.f32 %v923, %v1446
    %v1448 = vpop.f32.mrf.mxu0
    %1449 = vdwg.mxu0
    %v1450 = vmul.f32 %v1447, 0.5
    %v1451 = vtanh.pop %v1450
    %v1452 = vmul.f32 %v1451, 0.5
    %v1453 = vadd.f32 %v1452, 0.5
    %1454 = vst [vmem:[#allocation5 + $0x30] sm:$0xff] %v1453
    // Predicated region
    $region30: #{tpu_custom_call.1} parent=1 // pred_check
      _
    $region31: #{tpu_custom_call.1} parent=1 // pred_check_branch
      %1456 = sbr.rel (0) target = $region33
    $region32: #{tpu_custom_call.1} parent=1 // pred_region
      %s1458 = ssub.s32 896, 896
      %1459 = vsyncadd [#allocation4], %s1458
      %s1460 = sshll.u32 [#allocation5], 4
      %s1461 = int_to_ptr.vmem [resolvable:$true] %s1460
      %1466 = dma.vmem_to_hbm [thread:$0]  %s1461, 896, %s6, [#allocation4], 128, 128, 8
    $region33: #{tpu_custom_call.1} parent=1 // pred_fallthru
      _
    // Predicated region
    $region34: #{tpu_custom_call.1} parent=1 // pred_check
      _
    $region35: #{tpu_custom_call.1} parent=1 // pred_check_branch
      %1468 = sbr.rel (0) target = $region37
    $region36: #{tpu_custom_call.1} parent=1 // pred_region
      %1469 = dma.done [#allocation4], 896
    $region37: #{tpu_custom_call.1} parent=1 // pred_fallthru
      _
    %1470 = vsyncpa [#allocation3], 1
    %1471 = vsyncpa [#allocation4], 1

</llo_original>
